<compile_context>
chip_gen: v7x
topology: tpu7x:2x2x1
jax: 0.10.0
libtpu: 0.0.40
codegen_flags: <defaults>
</compile_context>

<pallas_src>
import jax
import jax.numpy as jnp
from jax.experimental import pallas as pl
from jax.experimental.pallas import tpu as pltpu


# ----------------------------------------------------------------------------
# Fused LeNet kernel
# ----------------------------------------------------------------------------
# Lane layouts used inside the kernel (TB = batch tile, from x_ref.shape[0]):
#   conv1 out row ho (TB,144): lane = (wo%2)*72 + (wo//2)*6  + oc  (wo 0..23, oc 0..5)
#   pooled1 row r   (TB, 72): lane = wj*6 + c                      (wj 0..11, c 0..5)
#   conv2 out row ho (TB,128): lane = (wo%2)*64 + (wo//2)*16 + oc  (wo 0..7, oc 0..15)
#   pooled2 flat    (TB,256): lane = ph*64 + pwo*16 + oc           (ph,pwo 0..3)
# The packed weights below are built to match these layouts exactly.

def _lenet_kernel(x_ref, w1_ref, b1_ref, w2_ref, b2_ref,
                  fc1w_ref, fc1b_ref, fc2w_ref, fc2b_ref,
                  fc3w_ref, fc3b_ref, out_ref):
    f32 = jnp.float32
    bf16 = jnp.bfloat16
    tb = x_ref.shape[0]

    x = x_ref[...]                                            # (TB, 784), lane = h*28 + w

    # ---- conv1 (1->6, 5x5 valid) + ReLU: ONE banded GEMM over all 24 rows ----
    # Stack the 24 overlapping 5-row windows along sublanes -> (24*TB, 140).
    lhs1 = jnp.concatenate(
        [x[:, ho * 28: ho * 28 + 140] for ho in range(24)], axis=0)
    act1 = jnp.maximum(
        jnp.dot(lhs1.astype(bf16), w1_ref[...], preferred_element_type=f32)
        + b1_ref[...], 0.0)                                   # (24*TB, 144)
    rows1 = [act1[ho * tb:(ho + 1) * tb, :] for ho in range(24)]

    # ---- 2x2 max pool -> 12 rows of (TB, 72), lane = wj*6 + c ----
    prow = []
    for r in range(12):
        t = jnp.maximum(rows1[2 * r], rows1[2 * r + 1])       # pool over height
        prow.append(jnp.maximum(t[:, 0:72], t[:, 72:144]))    # pool over width (parity halves)

    # ---- conv2 (6->16, 5x5 valid) + ReLU: ONE K=360 banded GEMM over 8 rows ----
    p_all = jnp.concatenate(prow, axis=1)                     # (TB, 864), lane = r*72 + wj*6 + c
    lhs2 = jnp.concatenate(
        [p_all[:, ho * 72: ho * 72 + 360] for ho in range(8)], axis=0)  # (8*TB, 360)
    act2 = jnp.maximum(
        jnp.dot(lhs2.astype(bf16), w2_ref[...], preferred_element_type=f32)
        + b2_ref[...], 0.0)                                   # (8*TB, 128)
    rows2 = [act2[ho * tb:(ho + 1) * tb, :] for ho in range(8)]

    # ---- 2x2 max pool + flatten -> (TB, 256), lane = ph*64 + pwo*16 + oc ----
    chunks = []
    for r in range(4):
        t = jnp.maximum(rows2[2 * r], rows2[2 * r + 1])
        chunks.append(jnp.maximum(t[:, 0:64], t[:, 64:128]))
    flat = jnp.concatenate(chunks, axis=1)                    # (TB, 256)

    # ---- fc1 (256->120) + ReLU: single dot, flatten already in the right order ----
    y = jnp.maximum(jnp.dot(flat.astype(bf16), fc1w_ref[...],
                            preferred_element_type=f32) + fc1b_ref[...], 0.0)

    # ---- fc2 (120->84) + ReLU ----
    y = jnp.maximum(jnp.dot(y.astype(bf16), fc2w_ref[...],
                            preferred_element_type=f32) + fc2b_ref[...], 0.0)

    # ---- fc3 (84->10, padded to 128 lanes) + ReLU (reference applies ReLU here too) ----
    y = jnp.maximum(jnp.dot(y.astype(bf16), fc3w_ref[...],
                            preferred_element_type=f32) + fc3b_ref[...], 0.0)

    out_ref[...] = y.astype(out_ref.dtype)                    # (TB, 128); lanes 10..127 == 0


# ----------------------------------------------------------------------------
# One-time host-side weight packing (torch layouts -> kernel layouts, bf16)
# ----------------------------------------------------------------------------

def pack_params(p):
    """Convert torch-layout LeNet params into the fused-kernel layouts.

    Called once at setup; the jitted forward pass performs no weight
    reshapes / transposes / casts at runtime.  Weights are bf16 (MXU-native),
    biases stay f32 (added to f32 MXU accumulators).
    """
    f32 = jnp.float32
    bf16 = jnp.bfloat16
    w1 = p["conv1_w"].astype(f32)          # (6, 1, 5, 5)
    b1 = p["conv1_b"].astype(f32)          # (6,)
    w2 = p["conv2_w"].astype(f32)          # (16, 6, 5, 5)
    b2 = p["conv2_b"].astype(f32)          # (16,)

    # conv1 banded weight: rows = ki*28 + wj, cols = (wo%2)*72 + (wo//2)*6 + oc
    w1k = jnp.transpose(w1[:, 0, :, :], (1, 2, 0))                # (ki, kj, oc)
    t1 = jnp.zeros((5, 28, 24, 6), f32)                           # [ki, wj, wo, oc]
    for kj in range(5):
        e = jnp.eye(28, 24, k=-kj, dtype=f32)                     # 1 iff wj == wo + kj
        t1 = t1 + jnp.einsum("wv,ko->kwvo", e, w1k[:, kj, :])
    w1_big = (t1.reshape(5, 28, 12, 2, 6)
                .transpose(0, 1, 3, 2, 4)
                .reshape(140, 144))
    b1_lane = jnp.tile(b1, 24).reshape(1, 144)

    # conv2 banded weight, K=360 formulation:
    # rows = ki*72 + wj*6 + c, cols = (wo%2)*64 + (wo//2)*16 + oc
    w2t = jnp.transpose(w2, (2, 1, 3, 0))                         # (ki, c, kj, oc)
    t2 = jnp.zeros((5, 12, 6, 8, 16), f32)                        # [ki, wj, c, wo, oc]
    for kj in range(5):
        e = jnp.eye(12, 8, k=-kj, dtype=f32)
        t2 = t2 + jnp.einsum("wv,kco->kwcvo", e, w2t[:, :, kj, :])
    w2_band = (t2.reshape(5, 12, 6, 4, 2, 16)
                 .transpose(0, 1, 2, 4, 3, 5)
                 .reshape(360, 128))
    b2_lane = jnp.tile(b2, 8).reshape(1, 128)

    # fc1: torch flatten order is (c, h, w); the kernel produces (h, w, c).
    fc1_wt = (p["fc1_w"].astype(f32).reshape(120, 16, 4, 4)
              .transpose(2, 3, 1, 0).reshape(256, 120))
    fc2_wt = p["fc2_w"].astype(f32).T                             # (120, 84)
    # fc3: pad output lanes 10..127 with zeros for an unmasked lane-dense store.
    fc3_wt = jnp.zeros((84, 128), f32).at[:, :10].set(p["fc3_w"].astype(f32).T)
    fc3_b = jnp.zeros((1, 128), f32).at[0, :10].set(p["fc3_b"].astype(f32))

    return {
        "w1": w1_big.astype(bf16), "b1": b1_lane,
        "w2": w2_band.astype(bf16), "b2": b2_lane,
        "fc1_w": fc1_wt.astype(bf16), "fc1_b": p["fc1_b"].astype(f32).reshape(1, 120),
        "fc2_w": fc2_wt.astype(bf16), "fc2_b": p["fc2_b"].astype(f32).reshape(1, 84),
        "fc3_w": fc3_wt.astype(bf16), "fc3_b": fc3_b,
    }


# ----------------------------------------------------------------------------
# Forward pass: batch-gridded pallas_call, weights resident, x/out pipelined
# ----------------------------------------------------------------------------

@jax.jit
def lenet_forward(packed, x):
    # x: (B, 1, 28, 28) NCHW float32
    B = x.shape[0]
    assert x.shape[1:] == (1, 28, 28), x.shape
    x_flat = x.astype(jnp.float32).reshape(B, 28 * 28)

    # Batch tile: sublane-aligned, capped at 256 so the activation footprint
    # (~35-50 KB/sample f32) stays well inside v7x's 64 MiB VMEM and v5e's
    # scoped limit; larger batches stream through the grid (double-buffered).
    TB = min(256, ((B + 7) // 8) * 8)
    B_pad = ((B + TB - 1) // TB) * TB
    if B_pad != B:
        x_flat = jnp.pad(x_flat, ((0, B_pad - B), (0, 0)))

    def _resident(shape):
        # Weight/bias blocks: same block for every grid step -> stay in VMEM.
        return pl.BlockSpec(shape, lambda i: (0, 0))

    weight_keys = ("w1", "b1", "w2", "b2",
                   "fc1_w", "fc1_b", "fc2_w", "fc2_b", "fc3_w", "fc3_b")
    in_specs = ([pl.BlockSpec((TB, 28 * 28), lambda i: (i, 0))]
                + [_resident(packed[k].shape) for k in weight_keys])

    out = pl.pallas_call(
        _lenet_kernel,
        out_shape=jax.ShapeDtypeStruct((B_pad, 128), jnp.float32),
        grid=(B_pad // TB,),
        in_specs=in_specs,
        out_specs=pl.BlockSpec((TB, 128), lambda i: (i, 0)),
        compiler_params=pltpu.CompilerParams(
            dimension_semantics=("parallel",),          # megacore on v7x
            vmem_limit_bytes=40 * 1024 * 1024),         # above v5e's 16 MiB default
    )(x_flat, *(packed[k] for k in weight_keys))

    return out[:B, :10]


# ----------------------------------------------------------------------------
# Pure-JAX reference (mirrors the PyTorch module exactly) for validation
# ----------------------------------------------------------------------------

def lenet_reference(params, x):
    def conv(x, w, b):
        y = jax.lax.conv_general_dilated(
            x, w, window_strides=(1, 1), padding="VALID",
            dimension_numbers=("NCHW", "OIHW", "NCHW"))
        return y + b[None, :, None, None]

    def pool(x):
        return jax.lax.reduce_window(
            x, -jnp.inf, jax.lax.max, (1, 1, 2, 2), (1, 1, 2, 2), "VALID")

    x = pool(jnp.maximum(conv(x, params["conv1_w"], params["conv1_b"]), 0.0))
    x = pool(jnp.maximum(conv(x, params["conv2_w"], params["conv2_b"]), 0.0))
    x = x.reshape(x.shape[0], -1)
    x = jnp.maximum(x @ params["fc1_w"].T + params["fc1_b"], 0.0)
    x = jnp.maximum(x @ params["fc2_w"].T + params["fc2_b"], 0.0)
    x = jnp.maximum(x @ params["fc3_w"].T + params["fc3_b"], 0.0)
    return x


# ----------------------------------------------------------------------------
# Parameters (deterministic, torch-default-like uniform init, torch layouts)
# ----------------------------------------------------------------------------

def _uniform(key, shape, fan_in):
    bound = 1.0 / jnp.sqrt(jnp.asarray(fan_in, jnp.float32))
    return jax.random.uniform(key, shape, jnp.float32, -bound, bound)


def init_lenet_params(key):
    ks = jax.random.split(key, 10)
    p = {}
    p["conv1_w"] = _uniform(ks[0], (6, 1, 5, 5), 1 * 5 * 5)
    p["conv1_b"] = _uniform(ks[1], (6,), 1 * 5 * 5)
    p["conv2_w"] = _uniform(ks[2], (16, 6, 5, 5), 6 * 5 * 5)
    p["conv2_b"] = _uniform(ks[3], (16,), 6 * 5 * 5)
    p["fc1_w"] = _uniform(ks[4], (120, 256), 256)
    p["fc1_b"] = _uniform(ks[5], (120,), 256)
    p["fc2_w"] = _uniform(ks[6], (84, 120), 120)
    p["fc2_b"] = _uniform(ks[7], (84,), 120)
    p["fc3_w"] = _uniform(ks[8], (10, 84), 84)
    p["fc3_b"] = _uniform(ks[9], (10,), 84)
    return p


if __name__ == "__main__":
    key = jax.random.PRNGKey(0)
    k_params, k_input = jax.random.split(key)
    params = init_lenet_params(k_params)        # torch-layout weights
    packed = pack_params(params)                # one-time kernel packing (bf16)

    # fc1 with 256 inputs implies a 28x28 single-channel image; batch = 2.
    x = jax.random.normal(k_input, (2, 1, 28, 28), jnp.float32)

    out = lenet_forward(packed, x)
    out = jax.block_until_ready(out)

    assert out.shape == (2, 10), out.shape
    assert out.dtype == jnp.float32
    assert bool(jnp.all(out >= 0.0))            # final ReLU (as in the reference module)

    # Cross-check the fused bf16-weight kernel against the pure-JAX f32 reference.
    with jax.default_matmul_precision("highest"):
        ref = lenet_reference(params, x)
    ref = jax.block_until_ready(ref)
    max_err = float(jnp.max(jnp.abs(out - ref)))
    assert max_err < 5e-2, f"mismatch vs reference: max abs err = {max_err}"

    print("KERNEL_OK")
</pallas_src>

<mosaic_0001>
module attributes {stable_mosaic.version = 11 : i64} {
  func.func @_lenet_kernel(%arg0: i32, %arg1: memref<8x784xf32, #tpu.memory_space<vmem>>, %arg2: memref<140x144xbf16, #tpu.memory_space<vmem>>, %arg3: memref<1x144xf32, #tpu.memory_space<vmem>>, %arg4: memref<360x128xbf16, #tpu.memory_space<vmem>>, %arg5: memref<1x128xf32, #tpu.memory_space<vmem>>, %arg6: memref<256x120xbf16, #tpu.memory_space<vmem>>, %arg7: memref<1x120xf32, #tpu.memory_space<vmem>>, %arg8: memref<120x84xbf16, #tpu.memory_space<vmem>>, %arg9: memref<1x84xf32, #tpu.memory_space<vmem>>, %arg10: memref<84x128xbf16, #tpu.memory_space<vmem>>, %arg11: memref<1x128xf32, #tpu.memory_space<vmem>>, %arg12: memref<8x128xf32, #tpu.memory_space<vmem>>) attributes {dimension_semantics = [#tpu.dimension_semantics<parallel>], iteration_bounds = array<i64: 1>, scalar_prefetch = 0 : i64, scratch_operands = 0 : i64, tpu.core_type = #tpu.core_type<tc>, window_params = [{transform_indices = @transform_0, window_bounds = array<i64: 8, 784>}, {pipeline_mode = #tpu.pipeline_mode<synchronous>, transform_indices = @transform_1, window_bounds = array<i64: 140, 144>}, {pipeline_mode = #tpu.pipeline_mode<synchronous>, transform_indices = @transform_2, window_bounds = array<i64: 1, 144>}, {pipeline_mode = #tpu.pipeline_mode<synchronous>, transform_indices = @transform_3, window_bounds = array<i64: 360, 128>}, {pipeline_mode = #tpu.pipeline_mode<synchronous>, transform_indices = @transform_4, window_bounds = array<i64: 1, 128>}, {pipeline_mode = #tpu.pipeline_mode<synchronous>, transform_indices = @transform_5, window_bounds = array<i64: 256, 120>}, {pipeline_mode = #tpu.pipeline_mode<synchronous>, transform_indices = @transform_6, window_bounds = array<i64: 1, 120>}, {pipeline_mode = #tpu.pipeline_mode<synchronous>, transform_indices = @transform_7, window_bounds = array<i64: 120, 84>}, {pipeline_mode = #tpu.pipeline_mode<synchronous>, transform_indices = @transform_8, window_bounds = array<i64: 1, 84>}, {pipeline_mode = #tpu.pipeline_mode<synchronous>, transform_indices = @transform_9, window_bounds = array<i64: 84, 128>}, {pipeline_mode = #tpu.pipeline_mode<synchronous>, transform_indices = @transform_10, window_bounds = array<i64: 1, 128>}, {transform_indices = @transform_11, window_bounds = array<i64: 8, 128>}]} {
    %c0 = arith.constant 0 : index
    %c0_0 = arith.constant 0 : index
    %0 = vector.load %arg1[%c0, %c0_0] : memref<8x784xf32, #tpu.memory_space<vmem>>, vector<8x784xf32>
    %1 = vector.extract_strided_slice %0 {offsets = [0, 0], sizes = [8, 140], strides = [1, 1]} : vector<8x784xf32> to vector<8x140xf32>
    %2 = vector.extract_strided_slice %0 {offsets = [0, 28], sizes = [8, 140], strides = [1, 1]} : vector<8x784xf32> to vector<8x140xf32>
    %3 = vector.extract_strided_slice %0 {offsets = [0, 56], sizes = [8, 140], strides = [1, 1]} : vector<8x784xf32> to vector<8x140xf32>
    %4 = vector.extract_strided_slice %0 {offsets = [0, 84], sizes = [8, 140], strides = [1, 1]} : vector<8x784xf32> to vector<8x140xf32>
    %5 = vector.extract_strided_slice %0 {offsets = [0, 112], sizes = [8, 140], strides = [1, 1]} : vector<8x784xf32> to vector<8x140xf32>
    %6 = vector.extract_strided_slice %0 {offsets = [0, 140], sizes = [8, 140], strides = [1, 1]} : vector<8x784xf32> to vector<8x140xf32>
    %7 = vector.extract_strided_slice %0 {offsets = [0, 168], sizes = [8, 140], strides = [1, 1]} : vector<8x784xf32> to vector<8x140xf32>
    %8 = vector.extract_strided_slice %0 {offsets = [0, 196], sizes = [8, 140], strides = [1, 1]} : vector<8x784xf32> to vector<8x140xf32>
    %9 = vector.extract_strided_slice %0 {offsets = [0, 224], sizes = [8, 140], strides = [1, 1]} : vector<8x784xf32> to vector<8x140xf32>
    %10 = vector.extract_strided_slice %0 {offsets = [0, 252], sizes = [8, 140], strides = [1, 1]} : vector<8x784xf32> to vector<8x140xf32>
    %11 = vector.extract_strided_slice %0 {offsets = [0, 280], sizes = [8, 140], strides = [1, 1]} : vector<8x784xf32> to vector<8x140xf32>
    %12 = vector.extract_strided_slice %0 {offsets = [0, 308], sizes = [8, 140], strides = [1, 1]} : vector<8x784xf32> to vector<8x140xf32>
    %13 = vector.extract_strided_slice %0 {offsets = [0, 336], sizes = [8, 140], strides = [1, 1]} : vector<8x784xf32> to vector<8x140xf32>
    %14 = vector.extract_strided_slice %0 {offsets = [0, 364], sizes = [8, 140], strides = [1, 1]} : vector<8x784xf32> to vector<8x140xf32>
    %15 = vector.extract_strided_slice %0 {offsets = [0, 392], sizes = [8, 140], strides = [1, 1]} : vector<8x784xf32> to vector<8x140xf32>
    %16 = vector.extract_strided_slice %0 {offsets = [0, 420], sizes = [8, 140], strides = [1, 1]} : vector<8x784xf32> to vector<8x140xf32>
    %17 = vector.extract_strided_slice %0 {offsets = [0, 448], sizes = [8, 140], strides = [1, 1]} : vector<8x784xf32> to vector<8x140xf32>
    %18 = vector.extract_strided_slice %0 {offsets = [0, 476], sizes = [8, 140], strides = [1, 1]} : vector<8x784xf32> to vector<8x140xf32>
    %19 = vector.extract_strided_slice %0 {offsets = [0, 504], sizes = [8, 140], strides = [1, 1]} : vector<8x784xf32> to vector<8x140xf32>
    %20 = vector.extract_strided_slice %0 {offsets = [0, 532], sizes = [8, 140], strides = [1, 1]} : vector<8x784xf32> to vector<8x140xf32>
    %21 = vector.extract_strided_slice %0 {offsets = [0, 560], sizes = [8, 140], strides = [1, 1]} : vector<8x784xf32> to vector<8x140xf32>
    %22 = vector.extract_strided_slice %0 {offsets = [0, 588], sizes = [8, 140], strides = [1, 1]} : vector<8x784xf32> to vector<8x140xf32>
    %23 = vector.extract_strided_slice %0 {offsets = [0, 616], sizes = [8, 140], strides = [1, 1]} : vector<8x784xf32> to vector<8x140xf32>
    %24 = vector.extract_strided_slice %0 {offsets = [0, 644], sizes = [8, 140], strides = [1, 1]} : vector<8x784xf32> to vector<8x140xf32>
    %25 = tpu.concatenate %1, %2, %3, %4, %5, %6, %7, %8, %9, %10, %11, %12, %13, %14, %15, %16 in 0 : vector<8x140xf32>, vector<8x140xf32>, vector<8x140xf32>, vector<8x140xf32>, vector<8x140xf32>, vector<8x140xf32>, vector<8x140xf32>, vector<8x140xf32>, vector<8x140xf32>, vector<8x140xf32>, vector<8x140xf32>, vector<8x140xf32>, vector<8x140xf32>, vector<8x140xf32>, vector<8x140xf32>, vector<8x140xf32> -> vector<128x140xf32>
    %26 = tpu.concatenate %17, %18, %19, %20, %21, %22, %23, %24 in 0 : vector<8x140xf32>, vector<8x140xf32>, vector<8x140xf32>, vector<8x140xf32>, vector<8x140xf32>, vector<8x140xf32>, vector<8x140xf32>, vector<8x140xf32> -> vector<64x140xf32>
    %27 = tpu.concatenate %25, %26 in 0 : vector<128x140xf32>, vector<64x140xf32> -> vector<192x140xf32>
    %28 = arith.truncf %27 : vector<192x140xf32> to vector<192x140xbf16>
    %c0_1 = arith.constant 0 : index
    %c0_2 = arith.constant 0 : index
    %29 = vector.load %arg2[%c0_1, %c0_2] : memref<140x144xbf16, #tpu.memory_space<vmem>>, vector<140x144xbf16>
    %cst = arith.constant dense<0.000000e+00> : vector<192x144xf32>
    %30 = tpu.matmul %28, %29, %cst {dimension_numbers = #tpu.dot_dimension_numbers<[1], [0], [0], [1], [0, 0, 1, 1], [], []>} : vector<192x140xbf16>, vector<140x144xbf16>, vector<192x144xf32> -> vector<192x144xf32>
    %c0_3 = arith.constant 0 : index
    %c0_4 = arith.constant 0 : index
    %31 = vector.load %arg3[%c0_3, %c0_4] : memref<1x144xf32, #tpu.memory_space<vmem>>, vector<1x144xf32>
    %32 = vector.broadcast %31 : vector<1x144xf32> to vector<192x144xf32>
    %33 = arith.addf %30, %32 : vector<192x144xf32>
    %cst_5 = arith.constant 0.000000e+00 : f32
    %34 = vector.broadcast %cst_5 : f32 to vector<192x144xf32>
    %35 = arith.maximumf %33, %34 : vector<192x144xf32>
    %36 = vector.extract_strided_slice %35 {offsets = [0, 0], sizes = [8, 144], strides = [1, 1]} : vector<192x144xf32> to vector<8x144xf32>
    %37 = vector.extract_strided_slice %35 {offsets = [8, 0], sizes = [8, 144], strides = [1, 1]} : vector<192x144xf32> to vector<8x144xf32>
    %38 = vector.extract_strided_slice %35 {offsets = [16, 0], sizes = [8, 144], strides = [1, 1]} : vector<192x144xf32> to vector<8x144xf32>
    %39 = vector.extract_strided_slice %35 {offsets = [24, 0], sizes = [8, 144], strides = [1, 1]} : vector<192x144xf32> to vector<8x144xf32>
    %40 = vector.extract_strided_slice %35 {offsets = [32, 0], sizes = [8, 144], strides = [1, 1]} : vector<192x144xf32> to vector<8x144xf32>
    %41 = vector.extract_strided_slice %35 {offsets = [40, 0], sizes = [8, 144], strides = [1, 1]} : vector<192x144xf32> to vector<8x144xf32>
    %42 = vector.extract_strided_slice %35 {offsets = [48, 0], sizes = [8, 144], strides = [1, 1]} : vector<192x144xf32> to vector<8x144xf32>
    %43 = vector.extract_strided_slice %35 {offsets = [56, 0], sizes = [8, 144], strides = [1, 1]} : vector<192x144xf32> to vector<8x144xf32>
    %44 = vector.extract_strided_slice %35 {offsets = [64, 0], sizes = [8, 144], strides = [1, 1]} : vector<192x144xf32> to vector<8x144xf32>
    %45 = vector.extract_strided_slice %35 {offsets = [72, 0], sizes = [8, 144], strides = [1, 1]} : vector<192x144xf32> to vector<8x144xf32>
    %46 = vector.extract_strided_slice %35 {offsets = [80, 0], sizes = [8, 144], strides = [1, 1]} : vector<192x144xf32> to vector<8x144xf32>
    %47 = vector.extract_strided_slice %35 {offsets = [88, 0], sizes = [8, 144], strides = [1, 1]} : vector<192x144xf32> to vector<8x144xf32>
    %48 = vector.extract_strided_slice %35 {offsets = [96, 0], sizes = [8, 144], strides = [1, 1]} : vector<192x144xf32> to vector<8x144xf32>
    %49 = vector.extract_strided_slice %35 {offsets = [104, 0], sizes = [8, 144], strides = [1, 1]} : vector<192x144xf32> to vector<8x144xf32>
    %50 = vector.extract_strided_slice %35 {offsets = [112, 0], sizes = [8, 144], strides = [1, 1]} : vector<192x144xf32> to vector<8x144xf32>
    %51 = vector.extract_strided_slice %35 {offsets = [120, 0], sizes = [8, 144], strides = [1, 1]} : vector<192x144xf32> to vector<8x144xf32>
    %52 = vector.extract_strided_slice %35 {offsets = [128, 0], sizes = [8, 144], strides = [1, 1]} : vector<192x144xf32> to vector<8x144xf32>
    %53 = vector.extract_strided_slice %35 {offsets = [136, 0], sizes = [8, 144], strides = [1, 1]} : vector<192x144xf32> to vector<8x144xf32>
    %54 = vector.extract_strided_slice %35 {offsets = [144, 0], sizes = [8, 144], strides = [1, 1]} : vector<192x144xf32> to vector<8x144xf32>
    %55 = vector.extract_strided_slice %35 {offsets = [152, 0], sizes = [8, 144], strides = [1, 1]} : vector<192x144xf32> to vector<8x144xf32>
    %56 = vector.extract_strided_slice %35 {offsets = [160, 0], sizes = [8, 144], strides = [1, 1]} : vector<192x144xf32> to vector<8x144xf32>
    %57 = vector.extract_strided_slice %35 {offsets = [168, 0], sizes = [8, 144], strides = [1, 1]} : vector<192x144xf32> to vector<8x144xf32>
    %58 = vector.extract_strided_slice %35 {offsets = [176, 0], sizes = [8, 144], strides = [1, 1]} : vector<192x144xf32> to vector<8x144xf32>
    %59 = vector.extract_strided_slice %35 {offsets = [184, 0], sizes = [8, 144], strides = [1, 1]} : vector<192x144xf32> to vector<8x144xf32>
    %60 = arith.maximumf %36, %37 : vector<8x144xf32>
    %61 = vector.extract_strided_slice %60 {offsets = [0, 0], sizes = [8, 72], strides = [1, 1]} : vector<8x144xf32> to vector<8x72xf32>
    %62 = vector.extract_strided_slice %60 {offsets = [0, 72], sizes = [8, 72], strides = [1, 1]} : vector<8x144xf32> to vector<8x72xf32>
    %63 = arith.maximumf %61, %62 : vector<8x72xf32>
    %64 = arith.maximumf %38, %39 : vector<8x144xf32>
    %65 = vector.extract_strided_slice %64 {offsets = [0, 0], sizes = [8, 72], strides = [1, 1]} : vector<8x144xf32> to vector<8x72xf32>
    %66 = vector.extract_strided_slice %64 {offsets = [0, 72], sizes = [8, 72], strides = [1, 1]} : vector<8x144xf32> to vector<8x72xf32>
    %67 = arith.maximumf %65, %66 : vector<8x72xf32>
    %68 = arith.maximumf %40, %41 : vector<8x144xf32>
    %69 = vector.extract_strided_slice %68 {offsets = [0, 0], sizes = [8, 72], strides = [1, 1]} : vector<8x144xf32> to vector<8x72xf32>
    %70 = vector.extract_strided_slice %68 {offsets = [0, 72], sizes = [8, 72], strides = [1, 1]} : vector<8x144xf32> to vector<8x72xf32>
    %71 = arith.maximumf %69, %70 : vector<8x72xf32>
    %72 = arith.maximumf %42, %43 : vector<8x144xf32>
    %73 = vector.extract_strided_slice %72 {offsets = [0, 0], sizes = [8, 72], strides = [1, 1]} : vector<8x144xf32> to vector<8x72xf32>
    %74 = vector.extract_strided_slice %72 {offsets = [0, 72], sizes = [8, 72], strides = [1, 1]} : vector<8x144xf32> to vector<8x72xf32>
    %75 = arith.maximumf %73, %74 : vector<8x72xf32>
    %76 = arith.maximumf %44, %45 : vector<8x144xf32>
    %77 = vector.extract_strided_slice %76 {offsets = [0, 0], sizes = [8, 72], strides = [1, 1]} : vector<8x144xf32> to vector<8x72xf32>
    %78 = vector.extract_strided_slice %76 {offsets = [0, 72], sizes = [8, 72], strides = [1, 1]} : vector<8x144xf32> to vector<8x72xf32>
    %79 = arith.maximumf %77, %78 : vector<8x72xf32>
    %80 = arith.maximumf %46, %47 : vector<8x144xf32>
    %81 = vector.extract_strided_slice %80 {offsets = [0, 0], sizes = [8, 72], strides = [1, 1]} : vector<8x144xf32> to vector<8x72xf32>
    %82 = vector.extract_strided_slice %80 {offsets = [0, 72], sizes = [8, 72], strides = [1, 1]} : vector<8x144xf32> to vector<8x72xf32>
    %83 = arith.maximumf %81, %82 : vector<8x72xf32>
    %84 = arith.maximumf %48, %49 : vector<8x144xf32>
    %85 = vector.extract_strided_slice %84 {offsets = [0, 0], sizes = [8, 72], strides = [1, 1]} : vector<8x144xf32> to vector<8x72xf32>
    %86 = vector.extract_strided_slice %84 {offsets = [0, 72], sizes = [8, 72], strides = [1, 1]} : vector<8x144xf32> to vector<8x72xf32>
    %87 = arith.maximumf %85, %86 : vector<8x72xf32>
    %88 = arith.maximumf %50, %51 : vector<8x144xf32>
    %89 = vector.extract_strided_slice %88 {offsets = [0, 0], sizes = [8, 72], strides = [1, 1]} : vector<8x144xf32> to vector<8x72xf32>
    %90 = vector.extract_strided_slice %88 {offsets = [0, 72], sizes = [8, 72], strides = [1, 1]} : vector<8x144xf32> to vector<8x72xf32>
    %91 = arith.maximumf %89, %90 : vector<8x72xf32>
    %92 = arith.maximumf %52, %53 : vector<8x144xf32>
    %93 = vector.extract_strided_slice %92 {offsets = [0, 0], sizes = [8, 72], strides = [1, 1]} : vector<8x144xf32> to vector<8x72xf32>
    %94 = vector.extract_strided_slice %92 {offsets = [0, 72], sizes = [8, 72], strides = [1, 1]} : vector<8x144xf32> to vector<8x72xf32>
    %95 = arith.maximumf %93, %94 : vector<8x72xf32>
    %96 = arith.maximumf %54, %55 : vector<8x144xf32>
    %97 = vector.extract_strided_slice %96 {offsets = [0, 0], sizes = [8, 72], strides = [1, 1]} : vector<8x144xf32> to vector<8x72xf32>
    %98 = vector.extract_strided_slice %96 {offsets = [0, 72], sizes = [8, 72], strides = [1, 1]} : vector<8x144xf32> to vector<8x72xf32>
    %99 = arith.maximumf %97, %98 : vector<8x72xf32>
    %100 = arith.maximumf %56, %57 : vector<8x144xf32>
    %101 = vector.extract_strided_slice %100 {offsets = [0, 0], sizes = [8, 72], strides = [1, 1]} : vector<8x144xf32> to vector<8x72xf32>
    %102 = vector.extract_strided_slice %100 {offsets = [0, 72], sizes = [8, 72], strides = [1, 1]} : vector<8x144xf32> to vector<8x72xf32>
    %103 = arith.maximumf %101, %102 : vector<8x72xf32>
    %104 = arith.maximumf %58, %59 : vector<8x144xf32>
    %105 = vector.extract_strided_slice %104 {offsets = [0, 0], sizes = [8, 72], strides = [1, 1]} : vector<8x144xf32> to vector<8x72xf32>
    %106 = vector.extract_strided_slice %104 {offsets = [0, 72], sizes = [8, 72], strides = [1, 1]} : vector<8x144xf32> to vector<8x72xf32>
    %107 = arith.maximumf %105, %106 : vector<8x72xf32>
    %108 = tpu.concatenate %63, %67, %71, %75, %79, %83, %87, %91, %95, %99, %103, %107 in 1 : vector<8x72xf32>, vector<8x72xf32>, vector<8x72xf32>, vector<8x72xf32>, vector<8x72xf32>, vector<8x72xf32>, vector<8x72xf32>, vector<8x72xf32>, vector<8x72xf32>, vector<8x72xf32>, vector<8x72xf32>, vector<8x72xf32> -> vector<8x864xf32>
    %109 = vector.extract_strided_slice %108 {offsets = [0, 0], sizes = [8, 360], strides = [1, 1]} : vector<8x864xf32> to vector<8x360xf32>
    %110 = vector.extract_strided_slice %108 {offsets = [0, 72], sizes = [8, 360], strides = [1, 1]} : vector<8x864xf32> to vector<8x360xf32>
    %111 = vector.extract_strided_slice %108 {offsets = [0, 144], sizes = [8, 360], strides = [1, 1]} : vector<8x864xf32> to vector<8x360xf32>
    %112 = vector.extract_strided_slice %108 {offsets = [0, 216], sizes = [8, 360], strides = [1, 1]} : vector<8x864xf32> to vector<8x360xf32>
    %113 = vector.extract_strided_slice %108 {offsets = [0, 288], sizes = [8, 360], strides = [1, 1]} : vector<8x864xf32> to vector<8x360xf32>
    %114 = vector.extract_strided_slice %108 {offsets = [0, 360], sizes = [8, 360], strides = [1, 1]} : vector<8x864xf32> to vector<8x360xf32>
    %115 = vector.extract_strided_slice %108 {offsets = [0, 432], sizes = [8, 360], strides = [1, 1]} : vector<8x864xf32> to vector<8x360xf32>
    %116 = vector.extract_strided_slice %108 {offsets = [0, 504], sizes = [8, 360], strides = [1, 1]} : vector<8x864xf32> to vector<8x360xf32>
    %117 = tpu.concatenate %109, %110, %111, %112, %113, %114, %115, %116 in 0 : vector<8x360xf32>, vector<8x360xf32>, vector<8x360xf32>, vector<8x360xf32>, vector<8x360xf32>, vector<8x360xf32>, vector<8x360xf32>, vector<8x360xf32> -> vector<64x360xf32>
    %118 = arith.truncf %117 : vector<64x360xf32> to vector<64x360xbf16>
    %c0_6 = arith.constant 0 : index
    %c0_7 = arith.constant 0 : index
    %119 = vector.load %arg4[%c0_6, %c0_7] : memref<360x128xbf16, #tpu.memory_space<vmem>>, vector<360x128xbf16>
    %cst_8 = arith.constant dense<0.000000e+00> : vector<64x128xf32>
    %120 = tpu.matmul %118, %119, %cst_8 {dimension_numbers = #tpu.dot_dimension_numbers<[1], [0], [0], [1], [0, 0, 1, 1], [], []>} : vector<64x360xbf16>, vector<360x128xbf16>, vector<64x128xf32> -> vector<64x128xf32>
    %c0_9 = arith.constant 0 : index
    %c0_10 = arith.constant 0 : index
    %121 = vector.load %arg5[%c0_9, %c0_10] : memref<1x128xf32, #tpu.memory_space<vmem>>, vector<1x128xf32>
    %122 = vector.broadcast %121 : vector<1x128xf32> to vector<64x128xf32>
    %123 = arith.addf %120, %122 : vector<64x128xf32>
    %cst_11 = arith.constant 0.000000e+00 : f32
    %124 = vector.broadcast %cst_11 : f32 to vector<64x128xf32>
    %125 = arith.maximumf %123, %124 : vector<64x128xf32>
    %126 = vector.extract_strided_slice %125 {offsets = [0, 0], sizes = [8, 128], strides = [1, 1]} : vector<64x128xf32> to vector<8x128xf32>
    %127 = vector.extract_strided_slice %125 {offsets = [8, 0], sizes = [8, 128], strides = [1, 1]} : vector<64x128xf32> to vector<8x128xf32>
    %128 = vector.extract_strided_slice %125 {offsets = [16, 0], sizes = [8, 128], strides = [1, 1]} : vector<64x128xf32> to vector<8x128xf32>
    %129 = vector.extract_strided_slice %125 {offsets = [24, 0], sizes = [8, 128], strides = [1, 1]} : vector<64x128xf32> to vector<8x128xf32>
    %130 = vector.extract_strided_slice %125 {offsets = [32, 0], sizes = [8, 128], strides = [1, 1]} : vector<64x128xf32> to vector<8x128xf32>
    %131 = vector.extract_strided_slice %125 {offsets = [40, 0], sizes = [8, 128], strides = [1, 1]} : vector<64x128xf32> to vector<8x128xf32>
    %132 = vector.extract_strided_slice %125 {offsets = [48, 0], sizes = [8, 128], strides = [1, 1]} : vector<64x128xf32> to vector<8x128xf32>
    %133 = vector.extract_strided_slice %125 {offsets = [56, 0], sizes = [8, 128], strides = [1, 1]} : vector<64x128xf32> to vector<8x128xf32>
    %134 = arith.maximumf %126, %127 : vector<8x128xf32>
    %135 = vector.extract_strided_slice %134 {offsets = [0, 0], sizes = [8, 64], strides = [1, 1]} : vector<8x128xf32> to vector<8x64xf32>
    %136 = vector.extract_strided_slice %134 {offsets = [0, 64], sizes = [8, 64], strides = [1, 1]} : vector<8x128xf32> to vector<8x64xf32>
    %137 = arith.maximumf %135, %136 : vector<8x64xf32>
    %138 = arith.maximumf %128, %129 : vector<8x128xf32>
    %139 = vector.extract_strided_slice %138 {offsets = [0, 0], sizes = [8, 64], strides = [1, 1]} : vector<8x128xf32> to vector<8x64xf32>
    %140 = vector.extract_strided_slice %138 {offsets = [0, 64], sizes = [8, 64], strides = [1, 1]} : vector<8x128xf32> to vector<8x64xf32>
    %141 = arith.maximumf %139, %140 : vector<8x64xf32>
    %142 = arith.maximumf %130, %131 : vector<8x128xf32>
    %143 = vector.extract_strided_slice %142 {offsets = [0, 0], sizes = [8, 64], strides = [1, 1]} : vector<8x128xf32> to vector<8x64xf32>
    %144 = vector.extract_strided_slice %142 {offsets = [0, 64], sizes = [8, 64], strides = [1, 1]} : vector<8x128xf32> to vector<8x64xf32>
    %145 = arith.maximumf %143, %144 : vector<8x64xf32>
    %146 = arith.maximumf %132, %133 : vector<8x128xf32>
    %147 = vector.extract_strided_slice %146 {offsets = [0, 0], sizes = [8, 64], strides = [1, 1]} : vector<8x128xf32> to vector<8x64xf32>
    %148 = vector.extract_strided_slice %146 {offsets = [0, 64], sizes = [8, 64], strides = [1, 1]} : vector<8x128xf32> to vector<8x64xf32>
    %149 = arith.maximumf %147, %148 : vector<8x64xf32>
    %150 = tpu.concatenate %137, %141, %145, %149 in 1 : vector<8x64xf32>, vector<8x64xf32>, vector<8x64xf32>, vector<8x64xf32> -> vector<8x256xf32>
    %151 = arith.truncf %150 : vector<8x256xf32> to vector<8x256xbf16>
    %c0_12 = arith.constant 0 : index
    %c0_13 = arith.constant 0 : index
    %152 = vector.load %arg6[%c0_12, %c0_13] : memref<256x120xbf16, #tpu.memory_space<vmem>>, vector<256x120xbf16>
    %cst_14 = arith.constant dense<0.000000e+00> : vector<8x120xf32>
    %153 = tpu.matmul %151, %152, %cst_14 {dimension_numbers = #tpu.dot_dimension_numbers<[1], [0], [0], [1], [0, 0, 1, 1], [], []>} : vector<8x256xbf16>, vector<256x120xbf16>, vector<8x120xf32> -> vector<8x120xf32>
    %c0_15 = arith.constant 0 : index
    %c0_16 = arith.constant 0 : index
    %154 = vector.load %arg7[%c0_15, %c0_16] : memref<1x120xf32, #tpu.memory_space<vmem>>, vector<1x120xf32>
    %155 = vector.broadcast %154 : vector<1x120xf32> to vector<8x120xf32>
    %156 = arith.addf %153, %155 : vector<8x120xf32>
    %cst_17 = arith.constant 0.000000e+00 : f32
    %157 = vector.broadcast %cst_17 : f32 to vector<8x120xf32>
    %158 = arith.maximumf %156, %157 : vector<8x120xf32>
    %159 = arith.truncf %158 : vector<8x120xf32> to vector<8x120xbf16>
    %c0_18 = arith.constant 0 : index
    %c0_19 = arith.constant 0 : index
    %160 = vector.load %arg8[%c0_18, %c0_19] : memref<120x84xbf16, #tpu.memory_space<vmem>>, vector<120x84xbf16>
    %cst_20 = arith.constant dense<0.000000e+00> : vector<8x84xf32>
    %161 = tpu.matmul %159, %160, %cst_20 {dimension_numbers = #tpu.dot_dimension_numbers<[1], [0], [0], [1], [0, 0, 1, 1], [], []>} : vector<8x120xbf16>, vector<120x84xbf16>, vector<8x84xf32> -> vector<8x84xf32>
    %c0_21 = arith.constant 0 : index
    %c0_22 = arith.constant 0 : index
    %162 = vector.load %arg9[%c0_21, %c0_22] : memref<1x84xf32, #tpu.memory_space<vmem>>, vector<1x84xf32>
    %163 = vector.broadcast %162 : vector<1x84xf32> to vector<8x84xf32>
    %164 = arith.addf %161, %163 : vector<8x84xf32>
    %cst_23 = arith.constant 0.000000e+00 : f32
    %165 = vector.broadcast %cst_23 : f32 to vector<8x84xf32>
    %166 = arith.maximumf %164, %165 : vector<8x84xf32>
    %167 = arith.truncf %166 : vector<8x84xf32> to vector<8x84xbf16>
    %c0_24 = arith.constant 0 : index
    %c0_25 = arith.constant 0 : index
    %168 = vector.load %arg10[%c0_24, %c0_25] : memref<84x128xbf16, #tpu.memory_space<vmem>>, vector<84x128xbf16>
    %cst_26 = arith.constant dense<0.000000e+00> : vector<8x128xf32>
    %169 = tpu.matmul %167, %168, %cst_26 {dimension_numbers = #tpu.dot_dimension_numbers<[1], [0], [0], [1], [0, 0, 1, 1], [], []>} : vector<8x84xbf16>, vector<84x128xbf16>, vector<8x128xf32> -> vector<8x128xf32>
    %c0_27 = arith.constant 0 : index
    %c0_28 = arith.constant 0 : index
    %170 = vector.load %arg11[%c0_27, %c0_28] : memref<1x128xf32, #tpu.memory_space<vmem>>, vector<1x128xf32>
    %171 = vector.broadcast %170 : vector<1x128xf32> to vector<8x128xf32>
    %172 = arith.addf %169, %171 : vector<8x128xf32>
    %cst_29 = arith.constant 0.000000e+00 : f32
    %173 = vector.broadcast %cst_29 : f32 to vector<8x128xf32>
    %174 = arith.maximumf %172, %173 : vector<8x128xf32>
    %c0_30 = arith.constant 0 : index
    %c0_31 = arith.constant 0 : index
    %175 = vector.load %arg12[%c0_30, %c0_31] : memref<8x128xf32, #tpu.memory_space<vmem>>, vector<8x128xf32>
    tpu.vector_store %arg12[%c0_30, %c0_31], %174 {strides = array<i32>} : memref<8x128xf32, #tpu.memory_space<vmem>>, vector<8x128xf32>,
    return
  }
  func.func @transform_0(%arg0: i32) -> (i32, i32) {
    %c0_i32 = arith.constant 0 : i32
    %c0_i32_0 = arith.constant 0 : i32
    return %arg0, %c0_i32 : i32, i32
  }
  func.func @transform_1(%arg0: i32) -> (i32, i32) {
    %c0_i32 = arith.constant 0 : i32
    %c0_i32_0 = arith.constant 0 : i32
    %c0_i32_1 = arith.constant 0 : i32
    return %c0_i32, %c0_i32_0 : i32, i32
  }
  func.func @transform_2(%arg0: i32) -> (i32, i32) {
    %c0_i32 = arith.constant 0 : i32
    %c0_i32_0 = arith.constant 0 : i32
    %c0_i32_1 = arith.constant 0 : i32
    return %c0_i32, %c0_i32_0 : i32, i32
  }
  func.func @transform_3(%arg0: i32) -> (i32, i32) {
    %c0_i32 = arith.constant 0 : i32
    %c0_i32_0 = arith.constant 0 : i32
    %c0_i32_1 = arith.constant 0 : i32
    return %c0_i32, %c0_i32_0 : i32, i32
  }
  func.func @transform_4(%arg0: i32) -> (i32, i32) {
    %c0_i32 = arith.constant 0 : i32
    %c0_i32_0 = arith.constant 0 : i32
    %c0_i32_1 = arith.constant 0 : i32
    return %c0_i32, %c0_i32_0 : i32, i32
  }
  func.func @transform_5(%arg0: i32) -> (i32, i32) {
    %c0_i32 = arith.constant 0 : i32
    %c0_i32_0 = arith.constant 0 : i32
    %c0_i32_1 = arith.constant 0 : i32
    return %c0_i32, %c0_i32_0 : i32, i32
  }
  func.func @transform_6(%arg0: i32) -> (i32, i32) {
    %c0_i32 = arith.constant 0 : i32
    %c0_i32_0 = arith.constant 0 : i32
    %c0_i32_1 = arith.constant 0 : i32
    return %c0_i32, %c0_i32_0 : i32, i32
  }
  func.func @transform_7(%arg0: i32) -> (i32, i32) {
    %c0_i32 = arith.constant 0 : i32
    %c0_i32_0 = arith.constant 0 : i32
    %c0_i32_1 = arith.constant 0 : i32
    return %c0_i32, %c0_i32_0 : i32, i32
  }
  func.func @transform_8(%arg0: i32) -> (i32, i32) {
    %c0_i32 = arith.constant 0 : i32
    %c0_i32_0 = arith.constant 0 : i32
    %c0_i32_1 = arith.constant 0 : i32
    return %c0_i32, %c0_i32_0 : i32, i32
  }
  func.func @transform_9(%arg0: i32) -> (i32, i32) {
    %c0_i32 = arith.constant 0 : i32
    %c0_i32_0 = arith.constant 0 : i32
    %c0_i32_1 = arith.constant 0 : i32
    return %c0_i32, %c0_i32_0 : i32, i32
  }
  func.func @transform_10(%arg0: i32) -> (i32, i32) {
    %c0_i32 = arith.constant 0 : i32
    %c0_i32_0 = arith.constant 0 : i32
    %c0_i32_1 = arith.constant 0 : i32
    return %c0_i32, %c0_i32_0 : i32, i32
  }
  func.func @transform_11(%arg0: i32) -> (i32, i32) {
    %c0_i32 = arith.constant 0 : i32
    %c0_i32_0 = arith.constant 0 : i32
    return %arg0, %c0_i32 : i32, i32
  }
}

</mosaic_0001>

<llo_original>
// kernel: lenet_forward.1
$region0: #{lenet_forward.1}
  #allocation0 [shape = 'u32[]', space=smem, size = 0x4, offset = 0x4, fixed_abs, tag = 'smem constant byte address 0x4 - core index']
  #allocation1 [shape = 'u32[144,128]{1,0:T(1,128)}', space=vmem, size = 0x12000, scoped, tag = 'internal scratch']
  %s0 = inlined_call_operand.vmem [shape: f32[8,784], index: 0, kind: input, shape index: {}]
  %s1 = inlined_call_operand.vmem [shape: bf16[140,144], index: 1, kind: input, shape index: {}]
  %s2 = inlined_call_operand.vmem [shape: f32[1,144], index: 2, kind: input, shape index: {}]
  %s3 = inlined_call_operand.vmem [shape: bf16[360,128], index: 3, kind: input, shape index: {}]
  %s4 = inlined_call_operand.vmem [shape: f32[1,128], index: 4, kind: input, shape index: {}]
  %s5 = inlined_call_operand.vmem [shape: bf16[256,120], index: 5, kind: input, shape index: {}]
  %s6 = inlined_call_operand.vmem [shape: f32[1,120], index: 6, kind: input, shape index: {}]
  %s7 = inlined_call_operand.vmem [shape: bf16[120,84], index: 7, kind: input, shape index: {}]
  %s8 = inlined_call_operand.vmem [shape: f32[1,84], index: 8, kind: input, shape index: {}]
  %s9 = inlined_call_operand.vmem [shape: bf16[84,128], index: 9, kind: input, shape index: {}]
  %s10 = inlined_call_operand.vmem [shape: f32[1,128], index: 10, kind: input, shape index: {}]
  %s11 = inlined_call_operand.vmem [shape: f32[8,128], index: 11, kind: output, shape index: {}]
  %s12 = sld [smem:[#allocation0]]
  $region54: #{lenet_forward.1} parent=0
    _
  %s14 = ssub.s32 1, %s12
  %s15 = scalar_select 0, %s14, %s12
  // Predicated region
  $region2: #{lenet_forward.1} parent=0 // pred_check
    _
  $region3: #{lenet_forward.1} parent=0 // pred_check_branch
    %17 = sbr.rel (0) target = $region5
  $region4: #{lenet_forward.1} parent=0 // pred_region
    _
  $region5: #{lenet_forward.1} parent=0 // pred_fallthru
    _
  // Predicated region
  $region6: #{lenet_forward.1} parent=0 // pred_check
    _
  $region7: #{lenet_forward.1} parent=0 // pred_check_branch
    %19 = sbr.rel (0) target = $region9
  $region8: #{lenet_forward.1} parent=0 // pred_region
    _
  $region9: #{lenet_forward.1} parent=0 // pred_fallthru
    _
  // Predicated region
  $region10: #{lenet_forward.1} parent=0 // pred_check
    _
  $region11: #{lenet_forward.1} parent=0 // pred_check_branch
    %21 = sbr.rel (0) target = $region13
  $region12: #{lenet_forward.1} parent=0 // pred_region
    _
  $region13: #{lenet_forward.1} parent=0 // pred_fallthru
    _
  // Predicated region
  $region14: #{lenet_forward.1} parent=0 // pred_check
    _
  $region15: #{lenet_forward.1} parent=0 // pred_check_branch
    %23 = sbr.rel (0) target = $region17
  $region16: #{lenet_forward.1} parent=0 // pred_region
    _
  $region17: #{lenet_forward.1} parent=0 // pred_fallthru
    _
  // Predicated region
  $region18: #{lenet_forward.1} parent=0 // pred_check
    _
  $region19: #{lenet_forward.1} parent=0 // pred_check_branch
    %25 = sbr.rel (0) target = $region21
  $region20: #{lenet_forward.1} parent=0 // pred_region
    _
  $region21: #{lenet_forward.1} parent=0 // pred_fallthru
    _
  // Predicated region
  $region22: #{lenet_forward.1} parent=0 // pred_check
    _
  $region23: #{lenet_forward.1} parent=0 // pred_check_branch
    %27 = sbr.rel (0) target = $region25
  $region24: #{lenet_forward.1} parent=0 // pred_region
    _
  $region25: #{lenet_forward.1} parent=0 // pred_fallthru
    _
  // Predicated region
  $region26: #{lenet_forward.1} parent=0 // pred_check
    _
  $region27: #{lenet_forward.1} parent=0 // pred_check_branch
    %29 = sbr.rel (0) target = $region29
  $region28: #{lenet_forward.1} parent=0 // pred_region
    _
  $region29: #{lenet_forward.1} parent=0 // pred_fallthru
    _
  // Predicated region
  $region30: #{lenet_forward.1} parent=0 // pred_check
    _
  $region31: #{lenet_forward.1} parent=0 // pred_check_branch
    %31 = sbr.rel (0) target = $region33
  $region32: #{lenet_forward.1} parent=0 // pred_region
    _
  $region33: #{lenet_forward.1} parent=0 // pred_fallthru
    _
  // Predicated region
  $region34: #{lenet_forward.1} parent=0 // pred_check
    _
  $region35: #{lenet_forward.1} parent=0 // pred_check_branch
    %33 = sbr.rel (0) target = $region37
  $region36: #{lenet_forward.1} parent=0 // pred_region
    _
  $region37: #{lenet_forward.1} parent=0 // pred_fallthru
    _
  // Predicated region
  $region38: #{lenet_forward.1} parent=0 // pred_check
    _
  $region39: #{lenet_forward.1} parent=0 // pred_check_branch
    %35 = sbr.rel (0) target = $region41
  $region40: #{lenet_forward.1} parent=0 // pred_region
    _
  $region41: #{lenet_forward.1} parent=0 // pred_fallthru
    _
  // Predicated region
  $region42: #{lenet_forward.1} parent=0 // pred_check
    _
  $region43: #{lenet_forward.1} parent=0 // pred_check_branch
    %37 = sbr.rel (0) target = $region45
  $region44: #{lenet_forward.1} parent=0 // pred_region
    _
  $region45: #{lenet_forward.1} parent=0 // pred_fallthru
    _
  %v39 = vld [vmem:[%s0] sm:$0xff]
  %v40 = vld [vmem:[%s0 + $0x8] sm:$0xff]
  %v41 = vld [vmem:[%s0 + $0x10] sm:$0xff]
  %v42 = vld [vmem:[%s0 + $0x18] sm:$0xff]
  %v43 = vld [vmem:[%s0 + $0x20] sm:$0xff]
  %v44 = vld [vmem:[%s0 + $0x28] sm:$0xff]
  %v45 = vld [vmem:[%s0 + $0x30] sm:$0xff]
  %48 = vrot.lane.b32.xlu0 %v39, 100
  %v49 = vpop.permute.xlu0 %48
  %50 = vrot.lane.b32.xlu0 %v40, 100
  %v51 = vpop.permute.xlu0 %50
  %vm52 = vcmask 818176
  %v53 = vsel %vm52, %v49, %v51
  %56 = vrot.lane.b32.xlu0 %v39, 72
  %v57 = vpop.permute.xlu0 %56
  %58 = vrot.lane.b32.xlu0 %v40, 72
  %v59 = vpop.permute.xlu0 %58
  %vm60 = vcmask 588800
  %v61 = vsel %vm60, %v57, %v59
  %64 = vrot.lane.b32.xlu0 %v39, 44
  %v65 = vpop.permute.xlu0 %64
  %66 = vrot.lane.b32.xlu0 %v40, 44
  %v67 = vpop.permute.xlu0 %66
  %vm68 = vcmask 359424
  %v69 = vsel %vm68, %v65, %v67
  %72 = vrot.lane.b32.xlu0 %v39, 16
  %v73 = vpop.permute.xlu0 %72
  %74 = vrot.lane.b32.xlu0 %v40, 16
  %v75 = vpop.permute.xlu0 %74
  %vm76 = vcmask 130048
  %v77 = vsel %vm76, %v73, %v75
  %81 = vrot.lane.b32.xlu0 %v40, 116
  %v82 = vpop.permute.xlu0 %81
  %83 = vrot.lane.b32.xlu0 %v41, 116
  %v84 = vpop.permute.xlu0 %83
  %vm85 = vcmask 949248
  %v86 = vsel %vm85, %v82, %v84
  %89 = vrot.lane.b32.xlu0 %v40, 88
  %v90 = vpop.permute.xlu0 %89
  %91 = vrot.lane.b32.xlu0 %v41, 88
  %v92 = vpop.permute.xlu0 %91
  %vm93 = vcmask 719872
  %v94 = vsel %vm93, %v90, %v92
  %97 = vrot.lane.b32.xlu0 %v40, 60
  %v98 = vpop.permute.xlu0 %97
  %99 = vrot.lane.b32.xlu0 %v41, 60
  %v100 = vpop.permute.xlu0 %99
  %vm101 = vcmask 490496
  %v102 = vsel %vm101, %v98, %v100
  %105 = vrot.lane.b32.xlu0 %v40, 32
  %v106 = vpop.permute.xlu0 %105
  %107 = vrot.lane.b32.xlu0 %v41, 32
  %v108 = vpop.permute.xlu0 %107
  %vm109 = vcmask 261120
  %v110 = vsel %vm109, %v106, %v108
  %114 = vrot.lane.b32.xlu0 %v40, 4
  %v115 = vpop.permute.xlu0 %114
  %116 = vrot.lane.b32.xlu0 %v41, 4
  %v117 = vpop.permute.xlu0 %116
  %118 = vrot.lane.b32.xlu0 %v42, 4
  %v119 = vpop.permute.xlu0 %118
  %vm120 = vcmask 31744
  %v121 = vsel %vm120, %v115, %v117
  %v122 = vsel %vm120, %v117, %v119
  %125 = vrot.lane.b32.xlu0 %v41, 104
  %v126 = vpop.permute.xlu0 %125
  %127 = vrot.lane.b32.xlu0 %v42, 104
  %v128 = vpop.permute.xlu0 %127
  %vm129 = vcmask 850944
  %v130 = vsel %vm129, %v126, %v128
  %133 = vrot.lane.b32.xlu0 %v41, 76
  %v134 = vpop.permute.xlu0 %133
  %135 = vrot.lane.b32.xlu0 %v42, 76
  %v136 = vpop.permute.xlu0 %135
  %vm137 = vcmask 621568
  %v138 = vsel %vm137, %v134, %v136
  %141 = vrot.lane.b32.xlu0 %v41, 48
  %v142 = vpop.permute.xlu0 %141
  %143 = vrot.lane.b32.xlu0 %v42, 48
  %v144 = vpop.permute.xlu0 %143
  %vm145 = vcmask 392192
  %v146 = vsel %vm145, %v142, %v144
  %149 = vrot.lane.b32.xlu0 %v41, 20
  %v150 = vpop.permute.xlu0 %149
  %151 = vrot.lane.b32.xlu0 %v42, 20
  %v152 = vpop.permute.xlu0 %151
  %vm153 = vcmask 162816
  %v154 = vsel %vm153, %v150, %v152
  %158 = vrot.lane.b32.xlu0 %v42, 120
  %v159 = vpop.permute.xlu0 %158
  %160 = vrot.lane.b32.xlu0 %v43, 120
  %v161 = vpop.permute.xlu0 %160
  %vm162 = vcmask 982016
  %v163 = vsel %vm162, %v159, %v161
  %166 = vrot.lane.b32.xlu0 %v42, 92
  %v167 = vpop.permute.xlu0 %166
  %168 = vrot.lane.b32.xlu0 %v43, 92
  %v169 = vpop.permute.xlu0 %168
  %vm170 = vcmask 752640
  %v171 = vsel %vm170, %v167, %v169
  %174 = vrot.lane.b32.xlu0 %v42, 100
  %v175 = vpop.permute.xlu0 %174
  %176 = vrot.lane.b32.xlu0 %v43, 100
  %v177 = vpop.permute.xlu0 %176
  %v178 = vsel %vm52, %v175, %v177
  %180 = vrot.lane.b32.xlu0 %v42, 72
  %v181 = vpop.permute.xlu0 %180
  %182 = vrot.lane.b32.xlu0 %v43, 72
  %v183 = vpop.permute.xlu0 %182
  %184 = vrot.lane.b32.xlu0 %v44, 72
  %v185 = vpop.permute.xlu0 %184
  %v186 = vsel %vm60, %v181, %v183
  %v187 = vsel %vm60, %v183, %v185
  %188 = vrot.lane.b32.xlu0 %v43, 44
  %v189 = vpop.permute.xlu0 %188
  %190 = vrot.lane.b32.xlu0 %v44, 44
  %v191 = vpop.permute.xlu0 %190
  %v192 = vsel %vm68, %v189, %v191
  %193 = vrot.lane.b32.xlu0 %v43, 16
  %v194 = vpop.permute.xlu0 %193
  %195 = vrot.lane.b32.xlu0 %v44, 16
  %v196 = vpop.permute.xlu0 %195
  %v197 = vsel %vm76, %v194, %v196
  %198 = vrot.lane.b32.xlu0 %v43, 116
  %v199 = vpop.permute.xlu0 %198
  %200 = vrot.lane.b32.xlu0 %v44, 116
  %v201 = vpop.permute.xlu0 %200
  %v202 = vsel %vm85, %v199, %v201
  %203 = vrot.lane.b32.xlu0 %v43, 88
  %v204 = vpop.permute.xlu0 %203
  %205 = vrot.lane.b32.xlu0 %v44, 88
  %v206 = vpop.permute.xlu0 %205
  %v207 = vsel %vm93, %v204, %v206
  %209 = vrot.lane.b32.xlu0 %v44, 60
  %v210 = vpop.permute.xlu0 %209
  %211 = vrot.lane.b32.xlu0 %v45, 60
  %v212 = vpop.permute.xlu0 %211
  %v213 = vsel %vm101, %v210, %v212
  %214 = vrot.lane.b32.xlu0 %v42, 64
  %v215 = vpop.permute.xlu0 %214
  %216 = vrot.lane.b32.xlu0 %v43, 64
  %v217 = vpop.permute.xlu0 %216
  %218 = vrot.lane.b32.xlu0 %v178, 64
  %v219 = vpop.permute.xlu0 %218
  %220 = vrot.lane.b32.xlu0 %v177, 64
  %v221 = vpop.permute.xlu0 %220
  %222 = vrot.lane.b32.xlu0 %v186, 64
  %v223 = vpop.permute.xlu0 %222
  %224 = vrot.lane.b32.xlu0 %v187, 64
  %v225 = vpop.permute.xlu0 %224
  %226 = vrot.lane.b32.xlu0 %v189, 64
  %v227 = vpop.permute.xlu0 %226
  %228 = vrot.lane.b32.xlu0 %v192, 64
  %v229 = vpop.permute.xlu0 %228
  %230 = vrot.lane.b32.xlu0 %v194, 64
  %v231 = vpop.permute.xlu0 %230
  %232 = vrot.lane.b32.xlu0 %v197, 64
  %v233 = vpop.permute.xlu0 %232
  %234 = vrot.lane.b32.xlu0 %v202, 64
  %v235 = vpop.permute.xlu0 %234
  %236 = vrot.lane.b32.xlu0 %v201, 64
  %v237 = vpop.permute.xlu0 %236
  %238 = vrot.lane.b32.xlu0 %v207, 64
  %v239 = vpop.permute.xlu0 %238
  %240 = vrot.lane.b32.xlu0 %v206, 64
  %v241 = vpop.permute.xlu0 %240
  %242 = vrot.lane.b32.xlu0 %v210, 64
  %v243 = vpop.permute.xlu0 %242
  %244 = vrot.lane.b32.xlu0 %v213, 64
  %v245 = vpop.permute.xlu0 %244
  %vm246 = vcmask 523264
  %v247 = vsel %vm246, %v215, %v217
  %v248 = vsel %vm246, %v219, %v221
  %v249 = vsel %vm246, %v223, %v225
  %v250 = vsel %vm246, %v227, %v229
  %v251 = vsel %vm246, %v231, %v233
  %v252 = vsel %vm246, %v235, %v237
  %v253 = vsel %vm246, %v239, %v241
  %v254 = vsel %vm246, %v243, %v245
  %v271 = vpack.c.bf16 %v53, %v39
  %v272 = vpack.c.bf16 %v51, %v40
  %v273 = vpack.c.bf16 %v69, %v61
  %v274 = vpack.c.bf16 %v67, %v59
  %v275 = vpack.c.bf16 %v86, %v77
  %v276 = vpack.c.bf16 %v84, %v75
  %v277 = vpack.c.bf16 %v102, %v94
  %v278 = vpack.c.bf16 %v100, %v92
  %v279 = vpack.c.bf16 %v121, %v110
  %v280 = vpack.c.bf16 %v122, %v108
  %v281 = vpack.c.bf16 %v138, %v130
  %v282 = vpack.c.bf16 %v136, %v128
  %v283 = vpack.c.bf16 %v154, %v146
  %v284 = vpack.c.bf16 %v152, %v144
  %v285 = vpack.c.bf16 %v171, %v163
  %v286 = vpack.c.bf16 %v169, %v161
  %v287 = vpack.c.bf16 %v248, %v247
  %v288 = vpack.c.bf16 %v221, %v217
  %v289 = vpack.c.bf16 %v250, %v249
  %v290 = vpack.c.bf16 %v229, %v225
  %v291 = vpack.c.bf16 %v252, %v251
  %v292 = vpack.c.bf16 %v237, %v233
  %v293 = vpack.c.bf16 %v254, %v253
  %v294 = vpack.c.bf16 %v245, %v241
  %v295 = vld [vmem:[%s1] sm:$0xff]
  %v296 = vld [vmem:[%s1 + $0x8] sm:$0xff]
  %v297 = vld [vmem:[%s1 + $0x10] sm:$0xff]
  %v298 = vld [vmem:[%s1 + $0x18] sm:$0xff]
  %v299 = vld [vmem:[%s1 + $0x20] sm:$0xff]
  %v300 = vld [vmem:[%s1 + $0x28] sm:$0xff]
  %v301 = vld [vmem:[%s1 + $0x30] sm:$0xff]
  %v302 = vld [vmem:[%s1 + $0x38] sm:$0xff]
  %v303 = vld [vmem:[%s1 + $0x40] sm:$0xff]
  %v304 = vld [vmem:[%s1 + $0x48] sm:$0xff]
  %v305 = vld [vmem:[%s1 + $0x50] sm:$0xff]
  %v306 = vld [vmem:[%s1 + $0x58] sm:$0xff]
  %v307 = vld [vmem:[%s1 + $0x60] sm:$0xff]
  %v308 = vld [vmem:[%s1 + $0x68] sm:$0xff]
  %v309 = vld [vmem:[%s1 + $0x70] sm:$0xff]
  %v310 = vld [vmem:[%s1 + $0x78] sm:$0xff]
  %v311 = vld [vmem:[%s1 + $0x80] sm:$0xff]
  %v312 = vld [vmem:[%s1 + $0x88] sm:$0x33]
  %v313 = vld [vmem:[%s2] sm:$0x3]
  %v315 = vlaneseq
  %v316 = vshrl.u32 %v315, 7
  %v317 = vsub.s32 0, %v316
  %v318 = vrot.slane %v313, %v317
  %v319 = vlaneseq
  %v320 = vshrl.u32 %v319, 7
  %v321 = vsub.s32 1, %v320
  %v322 = vrot.slane %v313, %v321
  %v343 = vunpack.c.l.b16 %v295
  %v344 = vunpack.c.h.b16 %v295
  %v345 = vunpack.c.l.b16 %v296
  %v346 = vunpack.c.h.b16 %v296
  %v347 = vunpack.c.l.b16 %v297
  %v348 = vunpack.c.h.b16 %v297
  %v349 = vunpack.c.l.b16 %v298
  %v350 = vunpack.c.h.b16 %v298
  %v351 = vunpack.c.l.b16 %v299
  %v352 = vunpack.c.h.b16 %v299
  %v353 = vunpack.c.l.b16 %v300
  %v354 = vunpack.c.h.b16 %v300
  %v355 = vunpack.c.l.b16 %v301
  %v356 = vunpack.c.h.b16 %v301
  %v357 = vunpack.c.l.b16 %v302
  %v358 = vunpack.c.h.b16 %v302
  %v359 = vunpack.c.l.b16 %v303
  %v360 = vunpack.c.h.b16 %v303
  %v361 = vunpack.c.l.b16 %v304
  %v362 = vunpack.c.h.b16 %v304
  %v363 = vunpack.c.l.b16 %v305
  %v364 = vunpack.c.h.b16 %v305
  %v365 = vunpack.c.l.b16 %v306
  %v366 = vunpack.c.h.b16 %v306
  %v367 = vunpack.c.l.b16 %v307
  %v368 = vunpack.c.h.b16 %v307
  %v369 = vunpack.c.l.b16 %v308
  %v370 = vunpack.c.h.b16 %v308
  %v371 = vunpack.c.l.b16 %v309
  %v372 = vunpack.c.h.b16 %v309
  %v373 = vunpack.c.l.b16 %v310
  %v374 = vunpack.c.h.b16 %v310
  %v375 = vunpack.c.l.b16 %v311
  %v376 = vunpack.c.h.b16 %v311
  %v377 = vunpack.c.l.b16 %v312
  %v378 = vunpack.c.h.b16 %v312
  %v379 = vpack.c.b16 %v345, %v343
  %v380 = vpack.c.b16 %v346, %v344
  %v381 = vpack.c.b16 %v349, %v347
  %v382 = vpack.c.b16 %v350, %v348
  %v383 = vpack.c.b16 %v353, %v351
  %v384 = vpack.c.b16 %v354, %v352
  %v385 = vpack.c.b16 %v357, %v355
  %v386 = vpack.c.b16 %v358, %v356
  %v387 = vpack.c.b16 %v361, %v359
  %v388 = vpack.c.b16 %v362, %v360
  %v389 = vpack.c.b16 %v365, %v363
  %v390 = vpack.c.b16 %v366, %v364
  %v391 = vpack.c.b16 %v369, %v367
  %v392 = vpack.c.b16 %v370, %v368
  %v393 = vpack.c.b16 %v373, %v371
  %v394 = vpack.c.b16 %v374, %v372
  %v395 = vpack.c.b16 %v377, %v375
  %v396 = vpack.c.b16 %v378, %v376
  %vm413 = vcmask 97280
  %v415 = vsel %vm413, %v272, 0
  %v418 = vsel %vm413, %v274, 0
  %v421 = vsel %vm413, %v276, 0
  %v424 = vsel %vm413, %v278, 0
  %v427 = vsel %vm413, %v280, 0
  %v430 = vsel %vm413, %v282, 0
  %v433 = vsel %vm413, %v284, 0
  %v436 = vsel %vm413, %v286, 0
  %v439 = vsel %vm413, %v288, 0
  %v442 = vsel %vm413, %v290, 0
  %v445 = vsel %vm413, %v292, 0
  %v448 = vsel %vm413, %v294, 0
  %vm450 = vcmask 1045504
  %v452 = vsel %vm450, %v395, 0
  %v455 = vsel %vm450, %v396, 0
  %457 = vmatprep.subr.bf16.mxu0 %v380
  %458 = vmatpush1.bf16.msra.mxu0 %v379
  %459 = vmatprep.subr.bf16.mxu0 %v382
  %460 = vmatpush1.bf16.msra.mxu0 %v381
  %461 = vmatprep.subr.bf16.mxu0 %v384
  %462 = vmatpush1.bf16.msra.mxu0 %v383
  %463 = vmatprep.subr.bf16.mxu0 %v386
  %464 = vmatpush1.bf16.msra.mxu0 %v385
  %465 = vmatprep.subr.bf16.mxu0 %v388
  %466 = vmatpush1.bf16.msra.mxu0 %v387
  %467 = vmatprep.subr.bf16.mxu0 %v390
  %468 = vmatpush1.bf16.msra.mxu0 %v389
  %469 = vmatprep.subr.bf16.mxu0 %v392
  %470 = vmatpush1.bf16.msra.mxu0 %v391
  %471 = vmatprep.subr.bf16.mxu0 %v394
  %472 = vmatpush1.bf16.msra.mxu0 %v393
  %473 = vmatprep.subr.bf16.mxu0 %v455
  %474 = vmatpush1.bf16.msra.mxu0 %v452
  %475 = vmatprep.subr.bf16.mxu0 0
  %476 = vmatpush1.bf16.msra.mxu0 0
  %477 = vmatprep.subr.bf16.mxu0 0
  %478 = vmatpush1.bf16.msra.mxu0 0
  %479 = vmatprep.subr.bf16.mxu0 0
  %480 = vmatpush1.bf16.msra.mxu0 0
  %481 = vmatprep.subr.bf16.mxu0 0
  %482 = vmatpush1.bf16.msra.mxu0 0
  %483 = vmatprep.subr.bf16.mxu0 0
  %484 = vmatpush1.bf16.msra.mxu0 0
  %485 = vmatprep.subr.bf16.mxu0 0
  %486 = vmatpush1.bf16.msra.mxu0 0
  %487 = vmatprep.subr.bf16.mxu0 0
  %488 = vmatpush1.bf16.msra.mxu0 0
  %489 = vmatprep.mubr.bf16.mxu0 %v415
  %490 = vmatmul.mubr.bf16.gmra.mrb[0].mxu0 %v271
  %v491 = vpop.f32.mrb[0].mxu0
  %v492 = vadd.f32 %v318, %v491
  %v493 = vpop.f32.mrb[0].mxu0
  %v494 = vadd.f32 %v322, %v493
  %v495 = vpop.f32.mrb[0].mxu0
  %v496 = vadd.f32 %v318, %v495
  %v497 = vpop.f32.mrb[0].mxu0
  %v498 = vadd.f32 %v322, %v497
  %499 = vmatprep.mubr.bf16.mxu0 %v418
  %500 = vmatmul.mubr.bf16.gmra.mrb[0].mxu0 %v273
  %v501 = vpop.f32.mrb[0].mxu0
  %v502 = vadd.f32 %v318, %v501
  %v503 = vpop.f32.mrb[0].mxu0
  %v504 = vadd.f32 %v322, %v503
  %v505 = vpop.f32.mrb[0].mxu0
  %v506 = vadd.f32 %v318, %v505
  %v507 = vpop.f32.mrb[0].mxu0
  %v508 = vadd.f32 %v322, %v507
  %509 = vmatprep.mubr.bf16.mxu0 %v421
  %510 = vmatmul.mubr.bf16.gmra.mrb[0].mxu0 %v275
  %v511 = vpop.f32.mrb[0].mxu0
  %v512 = vadd.f32 %v318, %v511
  %v513 = vpop.f32.mrb[0].mxu0
  %v514 = vadd.f32 %v322, %v513
  %v515 = vpop.f32.mrb[0].mxu0
  %v516 = vadd.f32 %v318, %v515
  %v517 = vpop.f32.mrb[0].mxu0
  %v518 = vadd.f32 %v322, %v517
  %519 = vmatprep.mubr.bf16.mxu0 %v424
  %520 = vmatmul.mubr.bf16.gmra.mrb[0].mxu0 %v277
  %v521 = vpop.f32.mrb[0].mxu0
  %v522 = vadd.f32 %v318, %v521
  %v523 = vpop.f32.mrb[0].mxu0
  %v524 = vadd.f32 %v322, %v523
  %v525 = vpop.f32.mrb[0].mxu0
  %v526 = vadd.f32 %v318, %v525
  %v527 = vpop.f32.mrb[0].mxu0
  %v528 = vadd.f32 %v322, %v527
  %529 = vmatprep.mubr.bf16.mxu0 %v427
  %530 = vmatmul.mubr.bf16.gmra.mrb[0].mxu0 %v279
  %v531 = vpop.f32.mrb[0].mxu0
  %v532 = vadd.f32 %v318, %v531
  %v533 = vpop.f32.mrb[0].mxu0
  %v534 = vadd.f32 %v322, %v533
  %v535 = vpop.f32.mrb[0].mxu0
  %v536 = vadd.f32 %v318, %v535
  %v537 = vpop.f32.mrb[0].mxu0
  %v538 = vadd.f32 %v322, %v537
  %539 = vmatprep.mubr.bf16.mxu0 %v430
  %540 = vmatmul.mubr.bf16.gmra.mrb[0].mxu0 %v281
  %v541 = vpop.f32.mrb[0].mxu0
  %v542 = vadd.f32 %v318, %v541
  %v543 = vpop.f32.mrb[0].mxu0
  %v544 = vadd.f32 %v322, %v543
  %v545 = vpop.f32.mrb[0].mxu0
  %v546 = vadd.f32 %v318, %v545
  %v547 = vpop.f32.mrb[0].mxu0
  %v548 = vadd.f32 %v322, %v547
  %549 = vmatprep.mubr.bf16.mxu0 %v433
  %550 = vmatmul.mubr.bf16.gmra.mrb[0].mxu0 %v283
  %v551 = vpop.f32.mrb[0].mxu0
  %v552 = vadd.f32 %v318, %v551
  %v553 = vpop.f32.mrb[0].mxu0
  %v554 = vadd.f32 %v322, %v553
  %v555 = vpop.f32.mrb[0].mxu0
  %v556 = vadd.f32 %v318, %v555
  %v557 = vpop.f32.mrb[0].mxu0
  %v558 = vadd.f32 %v322, %v557
  %559 = vmatprep.mubr.bf16.mxu0 %v436
  %560 = vmatmul.mubr.bf16.gmra.mrb[0].mxu0 %v285
  %v561 = vpop.f32.mrb[0].mxu0
  %v562 = vadd.f32 %v318, %v561
  %v563 = vpop.f32.mrb[0].mxu0
  %v564 = vadd.f32 %v322, %v563
  %v565 = vpop.f32.mrb[0].mxu0
  %v566 = vadd.f32 %v318, %v565
  %v567 = vpop.f32.mrb[0].mxu0
  %v568 = vadd.f32 %v322, %v567
  %569 = vmatprep.mubr.bf16.mxu0 %v439
  %570 = vmatmul.mubr.bf16.gmra.mrb[0].mxu0 %v287
  %v571 = vpop.f32.mrb[0].mxu0
  %v572 = vadd.f32 %v318, %v571
  %v573 = vpop.f32.mrb[0].mxu0
  %v574 = vadd.f32 %v322, %v573
  %v575 = vpop.f32.mrb[0].mxu0
  %v576 = vadd.f32 %v318, %v575
  %v577 = vpop.f32.mrb[0].mxu0
  %v578 = vadd.f32 %v322, %v577
  %579 = vmatprep.mubr.bf16.mxu0 %v442
  %580 = vmatmul.mubr.bf16.gmra.mrb[0].mxu0 %v289
  %v581 = vpop.f32.mrb[0].mxu0
  %v582 = vadd.f32 %v318, %v581
  %v583 = vpop.f32.mrb[0].mxu0
  %v584 = vadd.f32 %v322, %v583
  %v585 = vpop.f32.mrb[0].mxu0
  %v586 = vadd.f32 %v318, %v585
  %v587 = vpop.f32.mrb[0].mxu0
  %v588 = vadd.f32 %v322, %v587
  %589 = vmatprep.mubr.bf16.mxu0 %v445
  %590 = vmatmul.mubr.bf16.gmra.mrb[0].mxu0 %v291
  %v591 = vpop.f32.mrb[0].mxu0
  %v592 = vadd.f32 %v318, %v591
  %v593 = vpop.f32.mrb[0].mxu0
  %v594 = vadd.f32 %v322, %v593
  %v595 = vpop.f32.mrb[0].mxu0
  %v596 = vadd.f32 %v318, %v595
  %v597 = vpop.f32.mrb[0].mxu0
  %v598 = vadd.f32 %v322, %v597
  %599 = vmatprep.mubr.bf16.mxu0 %v448
  %600 = vmatmul.mubr.bf16.gmra.mrb[0].mxu0 %v293
  %v601 = vpop.f32.mrb[0].mxu0
  %v602 = vadd.f32 %v318, %v601
  %v603 = vpop.f32.mrb[0].mxu0
  %v604 = vadd.f32 %v322, %v603
  %v605 = vpop.f32.mrb[0].mxu0
  %v606 = vadd.f32 %v318, %v605
  %v607 = vpop.f32.mrb[0].mxu0
  %v608 = vadd.f32 %v322, %v607
  %609 = vdwg.mxu0
  %v610 = vmax.f32 %v492, 0.0
  %v611 = vmax.f32 %v494, 0.0
  %v612 = vmax.f32 %v496, 0.0
  %v613 = vmax.f32 %v498, 0.0
  %v614 = vmax.f32 %v502, 0.0
  %v615 = vmax.f32 %v504, 0.0
  %v616 = vmax.f32 %v506, 0.0
  %v617 = vmax.f32 %v508, 0.0
  %v618 = vmax.f32 %v512, 0.0
  %v619 = vmax.f32 %v514, 0.0
  %v620 = vmax.f32 %v516, 0.0
  %v621 = vmax.f32 %v518, 0.0
  %v622 = vmax.f32 %v522, 0.0
  %v623 = vmax.f32 %v524, 0.0
  %v624 = vmax.f32 %v526, 0.0
  %v625 = vmax.f32 %v528, 0.0
  %v626 = vmax.f32 %v532, 0.0
  %v627 = vmax.f32 %v534, 0.0
  %v628 = vmax.f32 %v536, 0.0
  %v629 = vmax.f32 %v538, 0.0
  %v630 = vmax.f32 %v542, 0.0
  %v631 = vmax.f32 %v544, 0.0
  %v632 = vmax.f32 %v546, 0.0
  %v633 = vmax.f32 %v548, 0.0
  %v634 = vmax.f32 %v552, 0.0
  %v635 = vmax.f32 %v554, 0.0
  %v636 = vmax.f32 %v556, 0.0
  %v637 = vmax.f32 %v558, 0.0
  %v638 = vmax.f32 %v562, 0.0
  %v639 = vmax.f32 %v564, 0.0
  %v640 = vmax.f32 %v566, 0.0
  %v641 = vmax.f32 %v568, 0.0
  %v642 = vmax.f32 %v572, 0.0
  %v643 = vmax.f32 %v574, 0.0
  %v644 = vmax.f32 %v576, 0.0
  %v645 = vmax.f32 %v578, 0.0
  %v646 = vmax.f32 %v582, 0.0
  %v647 = vmax.f32 %v584, 0.0
  %v648 = vmax.f32 %v586, 0.0
  %v649 = vmax.f32 %v588, 0.0
  %v650 = vmax.f32 %v592, 0.0
  %v651 = vmax.f32 %v594, 0.0
  %v652 = vmax.f32 %v596, 0.0
  %v653 = vmax.f32 %v598, 0.0
  %v654 = vmax.f32 %v602, 0.0
  %v655 = vmax.f32 %v604, 0.0
  %v656 = vmax.f32 %v606, 0.0
  %v657 = vmax.f32 %v608, 0.0
  %v658 = vmax.f32 %v610, %v612
  %v659 = vmax.f32 %v611, %v613
  %662 = vrot.lane.b32.xlu0 %v658, 56
  %v663 = vpop.permute.xlu0 %662
  %664 = vrot.lane.b32.xlu0 %v659, 56
  %v665 = vpop.permute.xlu0 %664
  %vm666 = vcmask 457728
  %v667 = vsel %vm666, %v663, %v665
  %v669 = vmax.f32 %v658, %v667
  %v670 = vmax.f32 %v614, %v616
  %v671 = vmax.f32 %v615, %v617
  %674 = vrot.lane.b32.xlu0 %v670, 56
  %v675 = vpop.permute.xlu0 %674
  %676 = vrot.lane.b32.xlu0 %v671, 56
  %v677 = vpop.permute.xlu0 %676
  %v678 = vsel %vm666, %v675, %v677
  %v680 = vmax.f32 %v670, %v678
  %v681 = vmax.f32 %v618, %v620
  %v682 = vmax.f32 %v619, %v621
  %685 = vrot.lane.b32.xlu0 %v681, 56
  %v686 = vpop.permute.xlu0 %685
  %687 = vrot.lane.b32.xlu0 %v682, 56
  %v688 = vpop.permute.xlu0 %687
  %v689 = vsel %vm666, %v686, %v688
  %v691 = vmax.f32 %v681, %v689
  %v692 = vmax.f32 %v622, %v624
  %v693 = vmax.f32 %v623, %v625
  %696 = vrot.lane.b32.xlu0 %v692, 56
  %v697 = vpop.permute.xlu0 %696
  %698 = vrot.lane.b32.xlu0 %v693, 56
  %v699 = vpop.permute.xlu0 %698
  %v700 = vsel %vm666, %v697, %v699
  %v702 = vmax.f32 %v692, %v700
  %v703 = vmax.f32 %v626, %v628
  %v704 = vmax.f32 %v627, %v629
  %707 = vrot.lane.b32.xlu0 %v703, 56
  %v708 = vpop.permute.xlu0 %707
  %709 = vrot.lane.b32.xlu0 %v704, 56
  %v710 = vpop.permute.xlu0 %709
  %v711 = vsel %vm666, %v708, %v710
  %v713 = vmax.f32 %v703, %v711
  %v714 = vmax.f32 %v630, %v632
  %v715 = vmax.f32 %v631, %v633
  %718 = vrot.lane.b32.xlu0 %v714, 56
  %v719 = vpop.permute.xlu0 %718
  %720 = vrot.lane.b32.xlu0 %v715, 56
  %v721 = vpop.permute.xlu0 %720
  %v722 = vsel %vm666, %v719, %v721
  %v724 = vmax.f32 %v714, %v722
  %v725 = vmax.f32 %v634, %v636
  %v726 = vmax.f32 %v635, %v637
  %729 = vrot.lane.b32.xlu0 %v725, 56
  %v730 = vpop.permute.xlu0 %729
  %731 = vrot.lane.b32.xlu0 %v726, 56
  %v732 = vpop.permute.xlu0 %731
  %v733 = vsel %vm666, %v730, %v732
  %v735 = vmax.f32 %v725, %v733
  %v736 = vmax.f32 %v638, %v640
  %v737 = vmax.f32 %v639, %v641
  %740 = vrot.lane.b32.xlu0 %v736, 56
  %v741 = vpop.permute.xlu0 %740
  %742 = vrot.lane.b32.xlu0 %v737, 56
  %v743 = vpop.permute.xlu0 %742
  %v744 = vsel %vm666, %v741, %v743
  %v746 = vmax.f32 %v736, %v744
  %v747 = vmax.f32 %v642, %v644
  %v748 = vmax.f32 %v643, %v645
  %751 = vrot.lane.b32.xlu0 %v747, 56
  %v752 = vpop.permute.xlu0 %751
  %753 = vrot.lane.b32.xlu0 %v748, 56
  %v754 = vpop.permute.xlu0 %753
  %v755 = vsel %vm666, %v752, %v754
  %v757 = vmax.f32 %v747, %v755
  %v758 = vmax.f32 %v646, %v648
  %v759 = vmax.f32 %v647, %v649
  %762 = vrot.lane.b32.xlu0 %v758, 56
  %v763 = vpop.permute.xlu0 %762
  %764 = vrot.lane.b32.xlu0 %v759, 56
  %v765 = vpop.permute.xlu0 %764
  %v766 = vsel %vm666, %v763, %v765
  %v768 = vmax.f32 %v758, %v766
  %v769 = vmax.f32 %v650, %v652
  %v770 = vmax.f32 %v651, %v653
  %773 = vrot.lane.b32.xlu0 %v769, 56
  %v774 = vpop.permute.xlu0 %773
  %775 = vrot.lane.b32.xlu0 %v770, 56
  %v776 = vpop.permute.xlu0 %775
  %v777 = vsel %vm666, %v774, %v776
  %v779 = vmax.f32 %v769, %v777
  %v780 = vmax.f32 %v654, %v656
  %v781 = vmax.f32 %v655, %v657
  %784 = vrot.lane.b32.xlu0 %v780, 56
  %v785 = vpop.permute.xlu0 %784
  %786 = vrot.lane.b32.xlu0 %v781, 56
  %v787 = vpop.permute.xlu0 %786
  %v788 = vsel %vm666, %v785, %v787
  %v790 = vmax.f32 %v780, %v788
  %792 = vrot.lane.b32.xlu0 %v680, 72
  %v793 = vpop.permute.xlu0 %792
  %796 = vrot.lane.b32.xlu0 %v691, 16
  %v797 = vpop.permute.xlu0 %796
  %800 = vrot.lane.b32.xlu0 %v702, 88
  %v801 = vpop.permute.xlu0 %800
  %804 = vrot.lane.b32.xlu0 %v713, 32
  %v805 = vpop.permute.xlu0 %804
  %808 = vrot.lane.b32.xlu0 %v724, 104
  %v809 = vpop.permute.xlu0 %808
  %812 = vrot.lane.b32.xlu0 %v735, 48
  %v813 = vpop.permute.xlu0 %812
  %816 = vrot.lane.b32.xlu0 %v746, 120
  %v817 = vpop.permute.xlu0 %816
  %820 = vrot.lane.b32.xlu0 %v757, 64
  %v821 = vpop.permute.xlu0 %820
  %824 = vrot.lane.b32.xlu0 %v768, 8
  %v825 = vpop.permute.xlu0 %824
  %828 = vrot.lane.b32.xlu0 %v779, 80
  %v829 = vpop.permute.xlu0 %828
  %832 = vrot.lane.b32.xlu0 %v790, 24
  %v833 = vpop.permute.xlu0 %832
  %v835 = vsel %vm60, %v669, %v793
  %v836 = vsel %vm76, %v793, %v797
  %v837 = vsel %vm93, %v836, %v801
  %v838 = vsel %vm109, %v801, %v805
  %v839 = vsel %vm129, %v838, %v809
  %v840 = vsel %vm145, %v809, %v813
  %v841 = vsel %vm162, %v840, %v817
  %v842 = vsel %vm246, %v817, %v821
  %vm843 = vcmask 64512
  %v844 = vsel %vm843, %v821, %v825
  %vm845 = vcmask 654336
  %v846 = vsel %vm845, %v844, %v829
  %vm847 = vcmask 195584
  %v848 = vsel %vm847, %v829, %v833
  %853 = vrot.lane.b32.xlu0 %v835, 56
  %v854 = vpop.permute.xlu0 %853
  %855 = vrot.lane.b32.xlu0 %v837, 56
  %v856 = vpop.permute.xlu0 %855
  %857 = vrot.lane.b32.xlu0 %v839, 56
  %v858 = vpop.permute.xlu0 %857
  %859 = vrot.lane.b32.xlu0 %v841, 56
  %v860 = vpop.permute.xlu0 %859
  %v861 = vsel %vm666, %v854, %v856
  %v862 = vsel %vm666, %v856, %v858
  %v863 = vsel %vm666, %v858, %v860
  %867 = vrot.lane.b32.xlu0 %v837, 112
  %v868 = vpop.permute.xlu0 %867
  %869 = vrot.lane.b32.xlu0 %v839, 112
  %v870 = vpop.permute.xlu0 %869
  %871 = vrot.lane.b32.xlu0 %v841, 112
  %v872 = vpop.permute.xlu0 %871
  %vm873 = vcmask 916480
  %v874 = vsel %vm873, %v868, %v870
  %v875 = vsel %vm873, %v870, %v872
  %880 = vrot.lane.b32.xlu0 %v837, 40
  %v881 = vpop.permute.xlu0 %880
  %882 = vrot.lane.b32.xlu0 %v839, 40
  %v883 = vpop.permute.xlu0 %882
  %884 = vrot.lane.b32.xlu0 %v841, 40
  %v885 = vpop.permute.xlu0 %884
  %886 = vrot.lane.b32.xlu0 %v842, 40
  %v887 = vpop.permute.xlu0 %886
  %vm888 = vcmask 326656
  %v889 = vsel %vm888, %v881, %v883
  %v890 = vsel %vm888, %v883, %v885
  %v891 = vsel %vm888, %v885, %v887
  %896 = vrot.lane.b32.xlu0 %v839, 96
  %v897 = vpop.permute.xlu0 %896
  %898 = vrot.lane.b32.xlu0 %v841, 96
  %v899 = vpop.permute.xlu0 %898
  %900 = vrot.lane.b32.xlu0 %v842, 96
  %v901 = vpop.permute.xlu0 %900
  %902 = vrot.lane.b32.xlu0 %v846, 96
  %v903 = vpop.permute.xlu0 %902
  %vm904 = vcmask 785408
  %v905 = vsel %vm904, %v897, %v899
  %v906 = vsel %vm904, %v899, %v901
  %v907 = vsel %vm904, %v901, %v903
  %911 = vrot.lane.b32.xlu0 %v839, 24
  %v912 = vpop.permute.xlu0 %911
  %913 = vrot.lane.b32.xlu0 %v841, 24
  %v914 = vpop.permute.xlu0 %913
  %915 = vrot.lane.b32.xlu0 %v842, 24
  %v916 = vpop.permute.xlu0 %915
  %917 = vrot.lane.b32.xlu0 %v846, 24
  %v918 = vpop.permute.xlu0 %917
  %v919 = vsel %vm847, %v912, %v914
  %v920 = vsel %vm847, %v914, %v916
  %v921 = vsel %vm847, %v916, %v918
  %926 = vrot.lane.b32.xlu0 %v841, 80
  %v927 = vpop.permute.xlu0 %926
  %928 = vrot.lane.b32.xlu0 %v842, 80
  %v929 = vpop.permute.xlu0 %928
  %930 = vrot.lane.b32.xlu0 %v846, 80
  %v931 = vpop.permute.xlu0 %930
  %932 = vrot.lane.b32.xlu0 %v848, 80
  %v933 = vpop.permute.xlu0 %932
  %v934 = vsel %vm845, %v927, %v929
  %v935 = vsel %vm845, %v929, %v931
  %v936 = vsel %vm845, %v931, %v933
  %940 = vrot.lane.b32.xlu0 %v841, 8
  %v941 = vpop.permute.xlu0 %940
  %942 = vrot.lane.b32.xlu0 %v842, 8
  %v943 = vpop.permute.xlu0 %942
  %944 = vrot.lane.b32.xlu0 %v846, 8
  %v945 = vpop.permute.xlu0 %944
  %946 = vrot.lane.b32.xlu0 %v848, 8
  %v947 = vpop.permute.xlu0 %946
  %v948 = vsel %vm843, %v941, %v943
  %v949 = vsel %vm843, %v943, %v945
  %v950 = vsel %vm843, %v945, %v947
  %v954 = vpack.c.bf16 %v861, %v835
  %v955 = vpack.c.bf16 %v862, %v837
  %v956 = vpack.c.bf16 %v863, %v839
  %v957 = vpack.c.bf16 %v889, %v874
  %v958 = vpack.c.bf16 %v890, %v875
  %v959 = vpack.c.bf16 %v891, %v872
  %v960 = vpack.c.bf16 %v919, %v905
  %v961 = vpack.c.bf16 %v920, %v906
  %v962 = vpack.c.bf16 %v921, %v907
  %v963 = vpack.c.bf16 %v948, %v934
  %v964 = vpack.c.bf16 %v949, %v935
  %v965 = vpack.c.bf16 %v950, %v936
  %v966 = vld [vmem:[%s3] sm:$0xf]
  %v967 = vld [vmem:[%s3 + $0x4] sm:$0xf]
  %v968 = vld [vmem:[%s3 + $0x8] sm:$0xf]
  %v969 = vld [vmem:[%s3 + $0xc] sm:$0xf]
  %v970 = vld [vmem:[%s3 + $0x10] sm:$0xf]
  %v971 = vld [vmem:[%s3 + $0x14] sm:$0xf]
  %v972 = vld [vmem:[%s3 + $0x18] sm:$0xf]
  %v973 = vld [vmem:[%s3 + $0x1c] sm:$0xf]
  %v974 = vld [vmem:[%s3 + $0x20] sm:$0xf]
  %v975 = vld [vmem:[%s3 + $0x24] sm:$0xf]
  %v976 = vld [vmem:[%s3 + $0x28] sm:$0xf]
  %v977 = vld [vmem:[%s3 + $0x2c] sm:$0xf]
  %v978 = vld [vmem:[%s3 + $0x30] sm:$0xf]
  %v979 = vld [vmem:[%s3 + $0x34] sm:$0xf]
  %v980 = vld [vmem:[%s3 + $0x38] sm:$0xf]
  %v981 = vld [vmem:[%s3 + $0x3c] sm:$0xf]
  %v982 = vld [vmem:[%s3 + $0x40] sm:$0xf]
  %v983 = vld [vmem:[%s3 + $0x44] sm:$0xf]
  %v984 = vld [vmem:[%s3 + $0x48] sm:$0xf]
  %v985 = vld [vmem:[%s3 + $0x4c] sm:$0xf]
  %v986 = vld [vmem:[%s3 + $0x50] sm:$0xf]
  %v987 = vld [vmem:[%s3 + $0x54] sm:$0xf]
  %v988 = vld [vmem:[%s3 + $0x58] sm:$0xf]
  %v989 = vld [vmem:[%s3 + $0x5c] sm:$0xf]
  %v990 = vld [vmem:[%s3 + $0x60] sm:$0xf]
  %v991 = vld [vmem:[%s3 + $0x64] sm:$0xf]
  %v992 = vld [vmem:[%s3 + $0x68] sm:$0xf]
  %v993 = vld [vmem:[%s3 + $0x6c] sm:$0xf]
  %v994 = vld [vmem:[%s3 + $0x70] sm:$0xf]
  %v995 = vld [vmem:[%s3 + $0x74] sm:$0xf]
  %v996 = vld [vmem:[%s3 + $0x78] sm:$0xf]
  %v997 = vld [vmem:[%s3 + $0x7c] sm:$0xf]
  %v998 = vld [vmem:[%s3 + $0x80] sm:$0xf]
  %v999 = vld [vmem:[%s3 + $0x84] sm:$0xf]
  %v1000 = vld [vmem:[%s3 + $0x88] sm:$0xf]
  %v1001 = vld [vmem:[%s3 + $0x8c] sm:$0xf]
  %v1002 = vld [vmem:[%s3 + $0x90] sm:$0xf]
  %v1003 = vld [vmem:[%s3 + $0x94] sm:$0xf]
  %v1004 = vld [vmem:[%s3 + $0x98] sm:$0xf]
  %v1005 = vld [vmem:[%s3 + $0x9c] sm:$0xf]
  %v1006 = vld [vmem:[%s3 + $0xa0] sm:$0xf]
  %v1007 = vld [vmem:[%s3 + $0xa4] sm:$0xf]
  %v1008 = vld [vmem:[%s3 + $0xa8] sm:$0xf]
  %v1009 = vld [vmem:[%s3 + $0xac] sm:$0xf]
  %v1010 = vld [vmem:[%s3 + $0xb0] sm:$0xf]
  %v1011 = vld [vmem:[%s4] sm:$0x1]
  %v1013 = vlaneseq
  %v1014 = vshrl.u32 %v1013, 7
  %v1015 = vsub.s32 0, %v1014
  %v1016 = vrot.slane %v1011, %v1015
  %v1063 = vunpack.c.l.b16 %v966
  %v1064 = vunpack.c.l.b16 %v967
  %v1065 = vunpack.c.l.b16 %v968
  %v1066 = vunpack.c.l.b16 %v969
  %v1067 = vunpack.c.l.b16 %v970
  %v1068 = vunpack.c.l.b16 %v971
  %v1069 = vunpack.c.l.b16 %v972
  %v1070 = vunpack.c.l.b16 %v973
  %v1071 = vunpack.c.l.b16 %v974
  %v1072 = vunpack.c.l.b16 %v975
  %v1073 = vunpack.c.l.b16 %v976
  %v1074 = vunpack.c.l.b16 %v977
  %v1075 = vunpack.c.l.b16 %v978
  %v1076 = vunpack.c.l.b16 %v979
  %v1077 = vunpack.c.l.b16 %v980
  %v1078 = vunpack.c.l.b16 %v981
  %v1079 = vunpack.c.l.b16 %v982
  %v1080 = vunpack.c.l.b16 %v983
  %v1081 = vunpack.c.l.b16 %v984
  %v1082 = vunpack.c.l.b16 %v985
  %v1083 = vunpack.c.l.b16 %v986
  %v1084 = vunpack.c.l.b16 %v987
  %v1085 = vunpack.c.l.b16 %v988
  %v1086 = vunpack.c.l.b16 %v989
  %v1087 = vunpack.c.l.b16 %v990
  %v1088 = vunpack.c.l.b16 %v991
  %v1089 = vunpack.c.l.b16 %v992
  %v1090 = vunpack.c.l.b16 %v993
  %v1091 = vunpack.c.l.b16 %v994
  %v1092 = vunpack.c.l.b16 %v995
  %v1093 = vunpack.c.l.b16 %v996
  %v1094 = vunpack.c.l.b16 %v997
  %v1095 = vunpack.c.l.b16 %v998
  %v1096 = vunpack.c.l.b16 %v999
  %v1097 = vunpack.c.l.b16 %v1000
  %v1098 = vunpack.c.l.b16 %v1001
  %v1099 = vunpack.c.l.b16 %v1002
  %v1100 = vunpack.c.l.b16 %v1003
  %v1101 = vunpack.c.l.b16 %v1004
  %v1102 = vunpack.c.l.b16 %v1005
  %v1103 = vunpack.c.l.b16 %v1006
  %v1104 = vunpack.c.l.b16 %v1007
  %v1105 = vunpack.c.l.b16 %v1008
  %v1106 = vunpack.c.l.b16 %v1009
  %v1107 = vunpack.c.l.b16 %v1010
  %v1108 = vpack.c.b16 %v1064, %v1063
  %v1109 = vpack.c.b16 %v1066, %v1065
  %v1110 = vpack.c.b16 %v1068, %v1067
  %v1111 = vpack.c.b16 %v1070, %v1069
  %v1112 = vpack.c.b16 %v1072, %v1071
  %v1113 = vpack.c.b16 %v1074, %v1073
  %v1114 = vpack.c.b16 %v1076, %v1075
  %v1115 = vpack.c.b16 %v1078, %v1077
  %v1116 = vpack.c.b16 %v1080, %v1079
  %v1117 = vpack.c.b16 %v1082, %v1081
  %v1118 = vpack.c.b16 %v1084, %v1083
  %v1119 = vpack.c.b16 %v1086, %v1085
  %v1120 = vpack.c.b16 %v1088, %v1087
  %v1121 = vpack.c.b16 %v1090, %v1089
  %v1122 = vpack.c.b16 %v1092, %v1091
  %v1123 = vpack.c.b16 %v1094, %v1093
  %v1124 = vpack.c.b16 %v1096, %v1095
  %v1125 = vpack.c.b16 %v1098, %v1097
  %v1126 = vpack.c.b16 %v1100, %v1099
  %v1127 = vpack.c.b16 %v1102, %v1101
  %v1128 = vpack.c.b16 %v1104, %v1103
  %v1129 = vpack.c.b16 %v1106, %v1105
  %v1130 = vpack.c.b16 %v1107, %v1107
  %v1154 = vsel %vm129, %v956, 0
  %v1157 = vsel %vm129, %v959, 0
  %v1160 = vsel %vm129, %v962, 0
  %v1163 = vsel %vm129, %v965, 0
  %vm1165 = vcmask 1043456
  %v1167 = vsel %vm1165, %v1130, 0
  %1169 = vmatprep.subr.bf16.mxu0 0
  %1170 = vmatpush1.bf16.msra.mxu0 %v1108
  %1171 = vmatprep.subr.bf16.mxu0 0
  %1172 = vmatpush1.bf16.msra.mxu0 %v1109
  %1173 = vmatprep.subr.bf16.mxu0 0
  %1174 = vmatpush1.bf16.msra.mxu0 %v1110
  %1175 = vmatprep.subr.bf16.mxu0 0
  %1176 = vmatpush1.bf16.msra.mxu0 %v1111
  %1177 = vmatprep.subr.bf16.mxu0 0
  %1178 = vmatpush1.bf16.msra.mxu0 %v1112
  %1179 = vmatprep.subr.bf16.mxu0 0
  %1180 = vmatpush1.bf16.msra.mxu0 %v1113
  %1181 = vmatprep.subr.bf16.mxu0 0
  %1182 = vmatpush1.bf16.msra.mxu0 %v1114
  %1183 = vmatprep.subr.bf16.mxu0 0
  %1184 = vmatpush1.bf16.msra.mxu0 %v1115
  %1185 = vmatprep.subr.bf16.mxu0 0
  %1186 = vmatpush1.bf16.msra.mxu0 %v1116
  %1187 = vmatprep.subr.bf16.mxu0 0
  %1188 = vmatpush1.bf16.msra.mxu0 %v1117
  %1189 = vmatprep.subr.bf16.mxu0 0
  %1190 = vmatpush1.bf16.msra.mxu0 %v1118
  %1191 = vmatprep.subr.bf16.mxu0 0
  %1192 = vmatpush1.bf16.msra.mxu0 %v1119
  %1193 = vmatprep.subr.bf16.mxu0 0
  %1194 = vmatpush1.bf16.msra.mxu0 %v1120
  %1195 = vmatprep.subr.bf16.mxu0 0
  %1196 = vmatpush1.bf16.msra.mxu0 %v1121
  %1197 = vmatprep.subr.bf16.mxu0 0
  %1198 = vmatpush1.bf16.msra.mxu0 %v1122
  %1199 = vmatprep.subr.bf16.mxu0 0
  %1200 = vmatpush1.bf16.msra.mxu0 %v1123
  %1201 = vmatprep.mubr.bf16.mxu0 %v955
  %1202 = vmatmul.mubr.bf16.gmra.mrb[0].mxu0 %v954
  %v1203 = vpop.f32.mrb[0].mxu0
  %v1204 = vadd.f32 %v1016, %v1203
  %v1205 = vpop.f32.mrb[0].mxu0
  %v1206 = vpop.f32.mrb[0].mxu0
  %v1207 = vadd.f32 %v1016, %v1206
  %v1208 = vpop.f32.mrb[0].mxu0
  %1209 = vmatprep.mubr.bf16.mxu0 %v958
  %1210 = vmatmul.mubr.bf16.gmra.mrb[0].mxu0 %v957
  %v1211 = vpop.f32.mrb[0].mxu0
  %v1212 = vadd.f32 %v1016, %v1211
  %v1213 = vpop.f32.mrb[0].mxu0
  %v1214 = vpop.f32.mrb[0].mxu0
  %v1215 = vadd.f32 %v1016, %v1214
  %v1216 = vpop.f32.mrb[0].mxu0
  %1217 = vmatprep.mubr.bf16.mxu0 %v961
  %1218 = vmatmul.mubr.bf16.gmra.mrb[0].mxu0 %v960
  %v1219 = vpop.f32.mrb[0].mxu0
  %v1220 = vadd.f32 %v1016, %v1219
  %v1221 = vpop.f32.mrb[0].mxu0
  %v1222 = vpop.f32.mrb[0].mxu0
  %v1223 = vadd.f32 %v1016, %v1222
  %v1224 = vpop.f32.mrb[0].mxu0
  %1225 = vmatprep.mubr.bf16.mxu0 %v964
  %1226 = vmatmul.mubr.bf16.gmra.mrb[0].mxu0 %v963
  %v1227 = vpop.f32.mrb[0].mxu0
  %v1228 = vadd.f32 %v1016, %v1227
  %v1229 = vpop.f32.mrb[0].mxu0
  %v1230 = vpop.f32.mrb[0].mxu0
  %v1231 = vadd.f32 %v1016, %v1230
  %v1232 = vpop.f32.mrb[0].mxu0
  %1233 = vdwg.mxu0
  %1234 = vmatprep.subr.bf16.mxu0 0
  %1235 = vmatpush1.bf16.msra.mxu0 %v1124
  %1236 = vmatprep.subr.bf16.mxu0 0
  %1237 = vmatpush1.bf16.msra.mxu0 %v1125
  %1238 = vmatprep.subr.bf16.mxu0 0
  %1239 = vmatpush1.bf16.msra.mxu0 %v1126
  %1240 = vmatprep.subr.bf16.mxu0 0
  %1241 = vmatpush1.bf16.msra.mxu0 %v1127
  %1242 = vmatprep.subr.bf16.mxu0 0
  %1243 = vmatpush1.bf16.msra.mxu0 %v1128
  %1244 = vmatprep.subr.bf16.mxu0 0
  %1245 = vmatpush1.bf16.msra.mxu0 %v1129
  %1246 = vmatprep.subr.bf16.mxu0 0
  %1247 = vmatpush1.bf16.msra.mxu0 %v1167
  %1248 = vmatprep.subr.bf16.mxu0 0
  %1249 = vmatpush1.bf16.msra.mxu0 0
  %1250 = vmatprep.subr.bf16.mxu0 0
  %1251 = vmatpush1.bf16.msra.mxu0 0
  %1252 = vmatprep.subr.bf16.mxu0 0
  %1253 = vmatpush1.bf16.msra.mxu0 0
  %1254 = vmatprep.subr.bf16.mxu0 0
  %1255 = vmatpush1.bf16.msra.mxu0 0
  %1256 = vmatprep.subr.bf16.mxu0 0
  %1257 = vmatpush1.bf16.msra.mxu0 0
  %1258 = vmatprep.subr.bf16.mxu0 0
  %1259 = vmatpush1.bf16.msra.mxu0 0
  %1260 = vmatprep.subr.bf16.mxu0 0
  %1261 = vmatpush1.bf16.msra.mxu0 0
  %1262 = vmatprep.subr.bf16.mxu0 0
  %1263 = vmatpush1.bf16.msra.mxu0 0
  %1264 = vmatprep.subr.bf16.mxu0 0
  %1265 = vmatpush1.bf16.msra.mxu0 0
  %1266 = vmatprep.mubr.bf16.mxu0 0
  %1267 = vmatmul.mubr.bf16.gmra.mrb[0].mxu0 %v1154
  %v1268 = vpop.f32.mrb[0].mxu0
  %v1269 = vadd.f32 %v1204, %v1268
  %v1270 = vpop.f32.mrb[0].mxu0
  %v1271 = vpop.f32.mrb[0].mxu0
  %v1272 = vadd.f32 %v1207, %v1271
  %v1273 = vpop.f32.mrb[0].mxu0
  %1274 = vmatprep.mubr.bf16.mxu0 0
  %1275 = vmatmul.mubr.bf16.gmra.mrb[0].mxu0 %v1157
  %v1276 = vpop.f32.mrb[0].mxu0
  %v1277 = vadd.f32 %v1212, %v1276
  %v1278 = vpop.f32.mrb[0].mxu0
  %v1279 = vpop.f32.mrb[0].mxu0
  %v1280 = vadd.f32 %v1215, %v1279
  %v1281 = vpop.f32.mrb[0].mxu0
  %1282 = vmatprep.mubr.bf16.mxu0 0
  %1283 = vmatmul.mubr.bf16.gmra.mrb[0].mxu0 %v1160
  %v1284 = vpop.f32.mrb[0].mxu0
  %v1285 = vadd.f32 %v1220, %v1284
  %v1286 = vpop.f32.mrb[0].mxu0
  %v1287 = vpop.f32.mrb[0].mxu0
  %v1288 = vadd.f32 %v1223, %v1287
  %v1289 = vpop.f32.mrb[0].mxu0
  %1290 = vmatprep.mubr.bf16.mxu0 0
  %1291 = vmatmul.mubr.bf16.gmra.mrb[0].mxu0 %v1163
  %v1292 = vpop.f32.mrb[0].mxu0
  %v1293 = vadd.f32 %v1228, %v1292
  %v1294 = vpop.f32.mrb[0].mxu0
  %v1295 = vpop.f32.mrb[0].mxu0
  %v1296 = vadd.f32 %v1231, %v1295
  %v1297 = vpop.f32.mrb[0].mxu0
  %1298 = vdwg.mxu0
  %v1299 = vmax.f32 %v1269, 0.0
  %v1300 = vmax.f32 %v1272, 0.0
  %v1301 = vmax.f32 %v1277, 0.0
  %v1302 = vmax.f32 %v1280, 0.0
  %v1303 = vmax.f32 %v1285, 0.0
  %v1304 = vmax.f32 %v1288, 0.0
  %v1305 = vmax.f32 %v1293, 0.0
  %v1306 = vmax.f32 %v1296, 0.0
  %v1307 = vmax.f32 %v1299, %v1300
  %1309 = vrot.lane.b32.xlu0 %v1307, 64
  %v1310 = vpop.permute.xlu0 %1309
  %v1312 = vmax.f32 %v1307, %v1310
  %v1313 = vmax.f32 %v1301, %v1302
  %1315 = vrot.lane.b32.xlu0 %v1313, 64
  %v1316 = vpop.permute.xlu0 %1315
  %v1318 = vmax.f32 %v1313, %v1316
  %v1319 = vmax.f32 %v1303, %v1304
  %1321 = vrot.lane.b32.xlu0 %v1319, 64
  %v1322 = vpop.permute.xlu0 %1321
  %v1324 = vmax.f32 %v1319, %v1322
  %v1325 = vmax.f32 %v1305, %v1306
  %1327 = vrot.lane.b32.xlu0 %v1325, 64
  %v1328 = vpop.permute.xlu0 %1327
  %v1330 = vmax.f32 %v1325, %v1328
  %1332 = vrot.lane.b32.xlu0 %v1318, 64
  %v1333 = vpop.permute.xlu0 %1332
  %1336 = vrot.lane.b32.xlu0 %v1330, 64
  %v1337 = vpop.permute.xlu0 %1336
  %v1339 = vsel %vm246, %v1312, %v1333
  %v1340 = vsel %vm246, %v1324, %v1337
  %v1341 = vpack.c.bf16 %v1339, %v1339
  %v1342 = vpack.c.bf16 %v1340, %v1340
  %v1343 = vld [vmem:[%s5] sm:$0xf]
  %v1344 = vld [vmem:[%s5 + $0x4] sm:$0xf]
  %v1345 = vld [vmem:[%s5 + $0x8] sm:$0xf]
  %v1346 = vld [vmem:[%s5 + $0xc] sm:$0xf]
  %v1347 = vld [vmem:[%s5 + $0x10] sm:$0xf]
  %v1348 = vld [vmem:[%s5 + $0x14] sm:$0xf]
  %v1349 = vld [vmem:[%s5 + $0x18] sm:$0xf]
  %v1350 = vld [vmem:[%s5 + $0x1c] sm:$0xf]
  %v1351 = vld [vmem:[%s5 + $0x20] sm:$0xf]
  %v1352 = vld [vmem:[%s5 + $0x24] sm:$0xf]
  %v1353 = vld [vmem:[%s5 + $0x28] sm:$0xf]
  %v1354 = vld [vmem:[%s5 + $0x2c] sm:$0xf]
  %v1355 = vld [vmem:[%s5 + $0x30] sm:$0xf]
  %v1356 = vld [vmem:[%s5 + $0x34] sm:$0xf]
  %v1357 = vld [vmem:[%s5 + $0x38] sm:$0xf]
  %v1358 = vld [vmem:[%s5 + $0x3c] sm:$0xf]
  %v1359 = vld [vmem:[%s5 + $0x40] sm:$0xf]
  %v1360 = vld [vmem:[%s5 + $0x44] sm:$0xf]
  %v1361 = vld [vmem:[%s5 + $0x48] sm:$0xf]
  %v1362 = vld [vmem:[%s5 + $0x4c] sm:$0xf]
  %v1363 = vld [vmem:[%s5 + $0x50] sm:$0xf]
  %v1364 = vld [vmem:[%s5 + $0x54] sm:$0xf]
  %v1365 = vld [vmem:[%s5 + $0x58] sm:$0xf]
  %v1366 = vld [vmem:[%s5 + $0x5c] sm:$0xf]
  %v1367 = vld [vmem:[%s5 + $0x60] sm:$0xf]
  %v1368 = vld [vmem:[%s5 + $0x64] sm:$0xf]
  %v1369 = vld [vmem:[%s5 + $0x68] sm:$0xf]
  %v1370 = vld [vmem:[%s5 + $0x6c] sm:$0xf]
  %v1371 = vld [vmem:[%s5 + $0x70] sm:$0xf]
  %v1372 = vld [vmem:[%s5 + $0x74] sm:$0xf]
  %v1373 = vld [vmem:[%s5 + $0x78] sm:$0xf]
  %v1374 = vld [vmem:[%s5 + $0x7c] sm:$0xf]
  %v1375 = vld [vmem:[%s6] sm:$0x1]
  %v1377 = vlaneseq
  %v1378 = vshrl.u32 %v1377, 7
  %v1379 = vsub.s32 0, %v1378
  %v1380 = vrot.slane %v1375, %v1379
  %v1414 = vunpack.c.l.b16 %v1343
  %v1415 = vunpack.c.l.b16 %v1344
  %v1416 = vunpack.c.l.b16 %v1345
  %v1417 = vunpack.c.l.b16 %v1346
  %v1418 = vunpack.c.l.b16 %v1347
  %v1419 = vunpack.c.l.b16 %v1348
  %v1420 = vunpack.c.l.b16 %v1349
  %v1421 = vunpack.c.l.b16 %v1350
  %v1422 = vunpack.c.l.b16 %v1351
  %v1423 = vunpack.c.l.b16 %v1352
  %v1424 = vunpack.c.l.b16 %v1353
  %v1425 = vunpack.c.l.b16 %v1354
  %v1426 = vunpack.c.l.b16 %v1355
  %v1427 = vunpack.c.l.b16 %v1356
  %v1428 = vunpack.c.l.b16 %v1357
  %v1429 = vunpack.c.l.b16 %v1358
  %v1430 = vunpack.c.l.b16 %v1359
  %v1431 = vunpack.c.l.b16 %v1360
  %v1432 = vunpack.c.l.b16 %v1361
  %v1433 = vunpack.c.l.b16 %v1362
  %v1434 = vunpack.c.l.b16 %v1363
  %v1435 = vunpack.c.l.b16 %v1364
  %v1436 = vunpack.c.l.b16 %v1365
  %v1437 = vunpack.c.l.b16 %v1366
  %v1438 = vunpack.c.l.b16 %v1367
  %v1439 = vunpack.c.l.b16 %v1368
  %v1440 = vunpack.c.l.b16 %v1369
  %v1441 = vunpack.c.l.b16 %v1370
  %v1442 = vunpack.c.l.b16 %v1371
  %v1443 = vunpack.c.l.b16 %v1372
  %v1444 = vunpack.c.l.b16 %v1373
  %v1445 = vunpack.c.l.b16 %v1374
  %v1446 = vpack.c.b16 %v1415, %v1414
  %v1447 = vpack.c.b16 %v1417, %v1416
  %v1448 = vpack.c.b16 %v1419, %v1418
  %v1449 = vpack.c.b16 %v1421, %v1420
  %v1450 = vpack.c.b16 %v1423, %v1422
  %v1451 = vpack.c.b16 %v1425, %v1424
  %v1452 = vpack.c.b16 %v1427, %v1426
  %v1453 = vpack.c.b16 %v1429, %v1428
  %v1454 = vpack.c.b16 %v1431, %v1430
  %v1455 = vpack.c.b16 %v1433, %v1432
  %v1456 = vpack.c.b16 %v1435, %v1434
  %v1457 = vpack.c.b16 %v1437, %v1436
  %v1458 = vpack.c.b16 %v1439, %v1438
  %v1459 = vpack.c.b16 %v1441, %v1440
  %v1460 = vpack.c.b16 %v1443, %v1442
  %v1461 = vpack.c.b16 %v1445, %v1444
  %1478 = vmatprep.subr.bf16.mxu0 0
  %1479 = vmatpush1.bf16.msra.mxu0 %v1446
  %1480 = vmatprep.subr.bf16.mxu0 0
  %1481 = vmatpush1.bf16.msra.mxu0 %v1447
  %1482 = vmatprep.subr.bf16.mxu0 0
  %1483 = vmatpush1.bf16.msra.mxu0 %v1448
  %1484 = vmatprep.subr.bf16.mxu0 0
  %1485 = vmatpush1.bf16.msra.mxu0 %v1449
  %1486 = vmatprep.subr.bf16.mxu0 0
  %1487 = vmatpush1.bf16.msra.mxu0 %v1450
  %1488 = vmatprep.subr.bf16.mxu0 0
  %1489 = vmatpush1.bf16.msra.mxu0 %v1451
  %1490 = vmatprep.subr.bf16.mxu0 0
  %1491 = vmatpush1.bf16.msra.mxu0 %v1452
  %1492 = vmatprep.subr.bf16.mxu0 0
  %1493 = vmatpush1.bf16.msra.mxu0 %v1453
  %1494 = vmatprep.subr.bf16.mxu0 0
  %1495 = vmatpush1.bf16.msra.mxu0 %v1454
  %1496 = vmatprep.subr.bf16.mxu0 0
  %1497 = vmatpush1.bf16.msra.mxu0 %v1455
  %1498 = vmatprep.subr.bf16.mxu0 0
  %1499 = vmatpush1.bf16.msra.mxu0 %v1456
  %1500 = vmatprep.subr.bf16.mxu0 0
  %1501 = vmatpush1.bf16.msra.mxu0 %v1457
  %1502 = vmatprep.subr.bf16.mxu0 0
  %1503 = vmatpush1.bf16.msra.mxu0 %v1458
  %1504 = vmatprep.subr.bf16.mxu0 0
  %1505 = vmatpush1.bf16.msra.mxu0 %v1459
  %1506 = vmatprep.subr.bf16.mxu0 0
  %1507 = vmatpush1.bf16.msra.mxu0 %v1460
  %1508 = vmatprep.subr.bf16.mxu0 0
  %1509 = vmatpush1.bf16.msra.mxu0 %v1461
  %1510 = vmatprep.mubr.bf16.mxu0 %v1342
  %1511 = vmatmul.mubr.bf16.gmra.mrb[0].mxu0 %v1341
  %v1512 = vpop.f32.mrb[0].mxu0
  %v1513 = vadd.f32 %v1380, %v1512
  %v1514 = vpop.f32.mrb[0].mxu0
  %v1515 = vpop.f32.mrb[0].mxu0
  %v1516 = vpop.f32.mrb[0].mxu0
  %1517 = vdwg.mxu0
  %v1518 = vmax.f32 %v1513, 0.0
  %v1519 = vpack.c.bf16 %v1518, %v1518
  %v1520 = vld [vmem:[%s7] sm:$0xf]
  %v1521 = vld [vmem:[%s7 + $0x4] sm:$0xf]
  %v1522 = vld [vmem:[%s7 + $0x8] sm:$0xf]
  %v1523 = vld [vmem:[%s7 + $0xc] sm:$0xf]
  %v1524 = vld [vmem:[%s7 + $0x10] sm:$0xf]
  %v1525 = vld [vmem:[%s7 + $0x14] sm:$0xf]
  %v1526 = vld [vmem:[%s7 + $0x18] sm:$0xf]
  %v1527 = vld [vmem:[%s7 + $0x1c] sm:$0xf]
  %v1528 = vld [vmem:[%s7 + $0x20] sm:$0xf]
  %v1529 = vld [vmem:[%s7 + $0x24] sm:$0xf]
  %v1530 = vld [vmem:[%s7 + $0x28] sm:$0xf]
  %v1531 = vld [vmem:[%s7 + $0x2c] sm:$0xf]
  %v1532 = vld [vmem:[%s7 + $0x30] sm:$0xf]
  %v1533 = vld [vmem:[%s7 + $0x34] sm:$0xf]
  %v1534 = vld [vmem:[%s7 + $0x38] sm:$0xf]
  %v1535 = vld [vmem:[%s8] sm:$0x1]
  %v1537 = vlaneseq
  %v1538 = vshrl.u32 %v1537, 7
  %v1539 = vsub.s32 0, %v1538
  %v1540 = vrot.slane %v1535, %v1539
  %v1557 = vunpack.c.l.b16 %v1520
  %v1558 = vunpack.c.l.b16 %v1521
  %v1559 = vunpack.c.l.b16 %v1522
  %v1560 = vunpack.c.l.b16 %v1523
  %v1561 = vunpack.c.l.b16 %v1524
  %v1562 = vunpack.c.l.b16 %v1525
  %v1563 = vunpack.c.l.b16 %v1526
  %v1564 = vunpack.c.l.b16 %v1527
  %v1565 = vunpack.c.l.b16 %v1528
  %v1566 = vunpack.c.l.b16 %v1529
  %v1567 = vunpack.c.l.b16 %v1530
  %v1568 = vunpack.c.l.b16 %v1531
  %v1569 = vunpack.c.l.b16 %v1532
  %v1570 = vunpack.c.l.b16 %v1533
  %v1571 = vunpack.c.l.b16 %v1534
  %v1572 = vpack.c.b16 %v1558, %v1557
  %v1573 = vpack.c.b16 %v1560, %v1559
  %v1574 = vpack.c.b16 %v1562, %v1561
  %v1575 = vpack.c.b16 %v1564, %v1563
  %v1576 = vpack.c.b16 %v1566, %v1565
  %v1577 = vpack.c.b16 %v1568, %v1567
  %v1578 = vpack.c.b16 %v1570, %v1569
  %v1579 = vpack.c.b16 %v1571, %v1571
  %v1588 = vsel %vm162, %v1519, 0
  %v1591 = vsel %vm1165, %v1579, 0
  %1593 = vmatprep.subr.bf16.mxu0 0
  %1594 = vmatpush1.bf16.msra.mxu0 %v1572
  %1595 = vmatprep.subr.bf16.mxu0 0
  %1596 = vmatpush1.bf16.msra.mxu0 %v1573
  %1597 = vmatprep.subr.bf16.mxu0 0
  %1598 = vmatpush1.bf16.msra.mxu0 %v1574
  %1599 = vmatprep.subr.bf16.mxu0 0
  %1600 = vmatpush1.bf16.msra.mxu0 %v1575
  %1601 = vmatprep.subr.bf16.mxu0 0
  %1602 = vmatpush1.bf16.msra.mxu0 %v1576
  %1603 = vmatprep.subr.bf16.mxu0 0
  %1604 = vmatpush1.bf16.msra.mxu0 %v1577
  %1605 = vmatprep.subr.bf16.mxu0 0
  %1606 = vmatpush1.bf16.msra.mxu0 %v1578
  %1607 = vmatprep.subr.bf16.mxu0 0
  %1608 = vmatpush1.bf16.msra.mxu0 %v1591
  %1609 = vmatprep.subr.bf16.mxu0 0
  %1610 = vmatpush1.bf16.msra.mxu0 0
  %1611 = vmatprep.subr.bf16.mxu0 0
  %1612 = vmatpush1.bf16.msra.mxu0 0
  %1613 = vmatprep.subr.bf16.mxu0 0
  %1614 = vmatpush1.bf16.msra.mxu0 0
  %1615 = vmatprep.subr.bf16.mxu0 0
  %1616 = vmatpush1.bf16.msra.mxu0 0
  %1617 = vmatprep.subr.bf16.mxu0 0
  %1618 = vmatpush1.bf16.msra.mxu0 0
  %1619 = vmatprep.subr.bf16.mxu0 0
  %1620 = vmatpush1.bf16.msra.mxu0 0
  %1621 = vmatprep.subr.bf16.mxu0 0
  %1622 = vmatpush1.bf16.msra.mxu0 0
  %1623 = vmatprep.subr.bf16.mxu0 0
  %1624 = vmatpush1.bf16.msra.mxu0 0
  %1625 = vmatprep.mubr.bf16.mxu0 0
  %1626 = vmatmul.mubr.bf16.gmra.mrb[0].mxu0 %v1588
  %v1627 = vpop.f32.mrb[0].mxu0
  %v1628 = vadd.f32 %v1540, %v1627
  %v1629 = vpop.f32.mrb[0].mxu0
  %v1630 = vpop.f32.mrb[0].mxu0
  %v1631 = vpop.f32.mrb[0].mxu0
  %1632 = vdwg.mxu0
  %v1633 = vmax.f32 %v1628, 0.0
  %v1634 = vpack.c.bf16 %v1633, %v1633
  %v1635 = vld [vmem:[%s9] sm:$0xf]
  %v1636 = vld [vmem:[%s9 + $0x4] sm:$0xf]
  %v1637 = vld [vmem:[%s9 + $0x8] sm:$0xf]
  %v1638 = vld [vmem:[%s9 + $0xc] sm:$0xf]
  %v1639 = vld [vmem:[%s9 + $0x10] sm:$0xf]
  %v1640 = vld [vmem:[%s9 + $0x14] sm:$0xf]
  %v1641 = vld [vmem:[%s9 + $0x18] sm:$0xf]
  %v1642 = vld [vmem:[%s9 + $0x1c] sm:$0xf]
  %v1643 = vld [vmem:[%s9 + $0x20] sm:$0xf]
  %v1644 = vld [vmem:[%s9 + $0x24] sm:$0xf]
  %v1645 = vld [vmem:[%s9 + $0x28] sm:$0x3]
  %v1646 = vld [vmem:[%s10] sm:$0x1]
  %v1648 = vlaneseq
  %v1649 = vshrl.u32 %v1648, 7
  %v1650 = vsub.s32 0, %v1649
  %v1651 = vrot.slane %v1646, %v1650
  %v1664 = vunpack.c.l.b16 %v1635
  %v1665 = vunpack.c.l.b16 %v1636
  %v1666 = vunpack.c.l.b16 %v1637
  %v1667 = vunpack.c.l.b16 %v1638
  %v1668 = vunpack.c.l.b16 %v1639
  %v1669 = vunpack.c.l.b16 %v1640
  %v1670 = vunpack.c.l.b16 %v1641
  %v1671 = vunpack.c.l.b16 %v1642
  %v1672 = vunpack.c.l.b16 %v1643
  %v1673 = vunpack.c.l.b16 %v1644
  %v1674 = vunpack.c.l.b16 %v1645
  %v1675 = vpack.c.b16 %v1665, %v1664
  %v1676 = vpack.c.b16 %v1667, %v1666
  %v1677 = vpack.c.b16 %v1669, %v1668
  %v1678 = vpack.c.b16 %v1671, %v1670
  %v1679 = vpack.c.b16 %v1673, %v1672
  %v1680 = vpack.c.b16 %v1674, %v1674
  %vm1686 = vcmask 687104
  %v1688 = vsel %vm1686, %v1634, 0
  %vm1690 = vcmask 1041408
  %v1692 = vsel %vm1690, %v1680, 0
  %1694 = vmatprep.subr.bf16.mxu0 0
  %1695 = vmatpush1.bf16.msra.mxu0 %v1675
  %1696 = vmatprep.subr.bf16.mxu0 0
  %1697 = vmatpush1.bf16.msra.mxu0 %v1676
  %1698 = vmatprep.subr.bf16.mxu0 0
  %1699 = vmatpush1.bf16.msra.mxu0 %v1677
  %1700 = vmatprep.subr.bf16.mxu0 0
  %1701 = vmatpush1.bf16.msra.mxu0 %v1678
  %1702 = vmatprep.subr.bf16.mxu0 0
  %1703 = vmatpush1.bf16.msra.mxu0 %v1679
  %1704 = vmatprep.subr.bf16.mxu0 0
  %1705 = vmatpush1.bf16.msra.mxu0 %v1692
  %1706 = vmatprep.subr.bf16.mxu0 0
  %1707 = vmatpush1.bf16.msra.mxu0 0
  %1708 = vmatprep.subr.bf16.mxu0 0
  %1709 = vmatpush1.bf16.msra.mxu0 0
  %1710 = vmatprep.subr.bf16.mxu0 0
  %1711 = vmatpush1.bf16.msra.mxu0 0
  %1712 = vmatprep.subr.bf16.mxu0 0
  %1713 = vmatpush1.bf16.msra.mxu0 0
  %1714 = vmatprep.subr.bf16.mxu0 0
  %1715 = vmatpush1.bf16.msra.mxu0 0
  %1716 = vmatprep.subr.bf16.mxu0 0
  %1717 = vmatpush1.bf16.msra.mxu0 0
  %1718 = vmatprep.subr.bf16.mxu0 0
  %1719 = vmatpush1.bf16.msra.mxu0 0
  %1720 = vmatprep.subr.bf16.mxu0 0
  %1721 = vmatpush1.bf16.msra.mxu0 0
  %1722 = vmatprep.subr.bf16.mxu0 0
  %1723 = vmatpush1.bf16.msra.mxu0 0
  %1724 = vmatprep.subr.bf16.mxu0 0
  %1725 = vmatpush1.bf16.msra.mxu0 0
  %1726 = vmatprep.mubr.bf16.mxu0 0
  %1727 = vmatmul.mubr.bf16.gmra.mrb[0].mxu0 %v1688
  %v1728 = vpop.f32.mrb[0].mxu0
  %v1729 = vadd.f32 %v1651, %v1728
  %v1730 = vpop.f32.mrb[0].mxu0
  %v1731 = vpop.f32.mrb[0].mxu0
  %v1732 = vpop.f32.mrb[0].mxu0
  %1733 = vdwg.mxu0
  %v1734 = vmax.f32 %v1729, 0.0
  %1735 = vst [vmem:[%s11] sm:$0xff] %v1734
  // Predicated region
  $region46: #{lenet_forward.1} parent=0 // pred_check
    _
  $region47: #{lenet_forward.1} parent=0 // pred_check_branch
    %1737 = sbr.rel (0) target = $region49
  $region48: #{lenet_forward.1} parent=0 // pred_region
    _
  $region49: #{lenet_forward.1} parent=0 // pred_fallthru
    _
  // Predicated region
  $region50: #{lenet_forward.1} parent=0 // pred_check
    _
  $region51: #{lenet_forward.1} parent=0 // pred_check_branch
    %1739 = sbr.rel (0) target = $region53
  $region52: #{lenet_forward.1} parent=0 // pred_region
    _
  $region53: #{lenet_forward.1} parent=0 // pred_fallthru
    _

</llo_original>
